<compile_context>
chip_gen: v6e
topology: v6e:2x2x1
jax: 0.10.0
libtpu: 0.0.40
codegen_flags: <defaults>
</compile_context>

<pallas_src>
import jax
import jax.numpy as jnp
from jax import lax
from jax.experimental import pallas as pl
from jax.experimental.pallas import tpu as pltpu


# ----------------------------- Pallas kernel --------------------------------
def _lstm_head_kernel(tmax_ref,   # [1]         i32  max(lens)  (SMEM, scalar prefetch)
                      xg_ref,     # [T, Bp, 4H] bf16 pre-scaled x @ W_ih + b (time-major)
                      lens_ref,   # [Bp, 1]     i32  sequence lengths (0 for padded rows)
                      whh_ref,    # [H, 4H]     bf16 column-pre-scaled recurrent weights
                      w1_ref,     # [H, D1p]    bf16 fc1 (zero-padded cols)
                      b1_ref,     # [1, D1p]    f32
                      w2_ref,     # [D1p, D2p]  bf16 fc2 (zero-padded rows/cols)
                      b2_ref,     # [1, D2p]    f32  (-1e30 in padded class columns)
                      out_ref,    # [Bp, D2p]   f32
                      h_scr,      # [Bp, H]     f32  scratch (hidden state)
                      c_scr):     # [Bp, H]     f32  scratch (cell state)
    T = xg_ref.shape[0]
    H = whh_ref.shape[0]

    t_max = tmax_ref[0]                     # scalar: last timestep any sequence is alive
    lens_v = lens_ref[...]                  # [Bp, 1] i32 (read once)
    whh = whh_ref[...]                      # [H, 4H] bf16 (hoisted out of the loop)

    # Per-lane post-transform constants for the single fused tanh pass
    # (gate order i, f, g, o): sigmoid blocks get 0.5*t + 0.5, the g block keeps tanh.
    lane = lax.broadcasted_iota(jnp.int32, (1, 4 * H), 1)
    is_g = jnp.logical_and(lane >= 2 * H, lane < 3 * H)
    post_scale = jnp.where(is_g, 1.0, 0.5).astype(jnp.float32)   # [1, 4H]
    post_off = jnp.where(is_g, 0.0, 0.5).astype(jnp.float32)     # [1, 4H]

    h_scr[...] = jnp.zeros_like(h_scr)
    c_scr[...] = jnp.zeros_like(c_scr)

    def step(t, carry):
        # Skip the whole MXU+EUP step once every sequence has finished (t >= max(lens)).
        @pl.when(t < t_max)
        def _():
            h = h_scr[...]
            c = c_scr[...]
            # Single MXU push on the serial path: recurrent projection only.
            # TODO(synk): if bundle dumps show W_hh re-staged each step, drive the MXU
            # explicitly (pltpu.matmul_push_rhs once + matmul_acc_lhs/matmul_pop per step).
            gates = xg_ref[t].astype(jnp.float32) + jnp.dot(
                h.astype(jnp.bfloat16), whh, preferred_element_type=jnp.float32)  # [Bp,4H]
            # ONE full-width EUP pass; sigmoid recovered with a per-lane FMA (VALU slot).
            act = jnp.tanh(gates) * post_scale + post_off
            i_g = act[:, 0 * H:1 * H]
            f_g = act[:, 1 * H:2 * H]
            g_g = act[:, 2 * H:3 * H]
            o_g = act[:, 3 * H:4 * H]
            c_new = f_g * c + i_g * g_g
            h_new = o_g * jnp.tanh(c_new)
            # pack_padded_sequence semantics: state only advances while t < len[b]; hence
            # h after the loop holds the hidden state of the last valid timestep.
            valid = lens_v > t              # [Bp, 1] bool
            h_scr[...] = jnp.where(valid, h_new, h)
            c_scr[...] = jnp.where(valid, c_new, c)
        return carry

    lax.fori_loop(0, T, step, 0, unroll=True)

    # fc1 -> tanh -> fc2 -> softmax (padded classes carry -1e30 bias -> exp() == 0).
    h = h_scr[...]
    z1 = jnp.tanh(jnp.dot(h.astype(jnp.bfloat16), w1_ref[...],
                          preferred_element_type=jnp.float32) + b1_ref[...])
    z2 = jnp.dot(z1.astype(jnp.bfloat16), w2_ref[...],
                 preferred_element_type=jnp.float32) + b2_ref[...]
    z2 = z2 - jnp.max(z2, axis=1, keepdims=True)
    e = jnp.exp(z2)
    # Exact divide (runs once, off the serial path) so output rows sum to 1 exactly.
    out_ref[...] = (e / jnp.sum(e, axis=1, keepdims=True)).astype(out_ref.dtype)


# ------------------------------ JAX wrapper ----------------------------------
def lstm_forward(tokens, lens, params):
    """tokens: [B, T] int32 (padded with padding_idx); lens: [B] int32."""
    embed = params["embed"]                       # [V+1, E], padding row is zeros
    w_ih, w_hh, b = params["w_ih"], params["w_hh"], params["b"]
    w1, b1, w2, b2 = params["w1"], params["b1"], params["w2"], params["b2"]

    B, T = tokens.shape
    H = w_hh.shape[0]
    D1, D2 = w1.shape[1], w2.shape[1]

    LANE, SUB = 128, 8
    # NOTE: per-step MXU/EUP latency is nearly flat in Bp; batching many sequences per
    # call (Bp up to ~128 on v5e, ~256 on v6e/v7x) amortizes the serial recurrence.
    Bp = max(SUB, ((B + SUB - 1) // SUB) * SUB)
    D1p = ((D1 + LANE - 1) // LANE) * LANE
    D2p = ((D2 + LANE - 1) // LANE) * LANE

    # --- glue (fused by XLA, outside the serial recurrence) ---------------------------
    # Pad batch to the 8-sublane tile; padded rows get len 0 -> their state never updates.
    tokens_p = jnp.pad(tokens.astype(jnp.int32), ((0, Bp - B), (0, 0)))
    lens_p = jnp.pad(lens.astype(jnp.int32), (0, Bp - B)).reshape(Bp, 1)
    t_max = jnp.max(lens).astype(jnp.int32).reshape(1)          # scalar prefetch (SMEM)

    # Fold the sigmoid "x/2" pre-scale into the weights so the kernel needs only one
    # tanh pass per step (gate order i, f, g, o: 0.5 everywhere except the g block).
    pre = jnp.concatenate([jnp.full((H,), 0.5, jnp.float32),
                           jnp.full((H,), 0.5, jnp.float32),
                           jnp.ones((H,), jnp.float32),
                           jnp.full((H,), 0.5, jnp.float32)])[None, :]      # [1, 4H]

    # Fuse embedding gather + input projection: project the tiny [V+1, E] table once
    # (f32), apply the pre-scale, cast to bf16, then one time-major gather. bf16 halves
    # the only O(T*B*4H) HBM/VMEM stream.
    proj_tbl = (jnp.dot(embed, w_ih, preferred_element_type=jnp.float32) + b) * pre
    xg = jnp.take(proj_tbl.astype(jnp.bfloat16), tokens_p.T, axis=0)        # [T, Bp, 4H]

    # Lane-dense (128-wide) classifier weights/biases; padded classes get -1e30 bias so
    # the in-kernel softmax ignores them. Matmul operands bf16, accumulation f32.
    whh_s = (w_hh * pre).astype(jnp.bfloat16)                               # [H, 4H]
    w1_p = jnp.zeros((H, D1p), jnp.bfloat16).at[:, :D1].set(w1.astype(jnp.bfloat16))
    b1_p = jnp.zeros((1, D1p), jnp.float32).at[:, :D1].set(b1)
    w2_p = jnp.zeros((D1p, D2p), jnp.bfloat16).at[:D1, :D2].set(w2.astype(jnp.bfloat16))
    b2_p = jnp.full((1, D2p), -1e30, jnp.float32).at[:, :D2].set(b2)

    def const_spec(a):
        nd = a.ndim
        return pl.BlockSpec(a.shape, lambda i, tmax, _nd=nd: (0,) * _nd)

    # TODO(synk): before scaling T or B, block xg over time (BlockSpec((T_blk, Bp, 4H),
    # lambda t, ...: (t, 0, 0)), "arbitrary" time axis, h/c carried in scratch across
    # grid steps) and add a leading "parallel" batch-tile axis (v7x 2nd TensorCore);
    # size blocks for v7x's 64 MiB VMEM and set vmem_limit_bytes.
    out = pl.pallas_call(
        _lstm_head_kernel,
        out_shape=jax.ShapeDtypeStruct((Bp, D2p), jnp.float32),
        grid_spec=pltpu.PrefetchScalarGridSpec(
            num_scalar_prefetch=1,
            grid=(1,),
            in_specs=[const_spec(xg), const_spec(lens_p), const_spec(whh_s),
                      const_spec(w1_p), const_spec(b1_p),
                      const_spec(w2_p), const_spec(b2_p)],
            out_specs=pl.BlockSpec((Bp, D2p), lambda i, tmax: (0, 0)),
            scratch_shapes=[pltpu.VMEM((Bp, H), jnp.float32),
                            pltpu.VMEM((Bp, H), jnp.float32)]),
        compiler_params=pltpu.CompilerParams(dimension_semantics=("arbitrary",)),
    )(t_max, xg, lens_p, whh_s, w1_p, b1_p, w2_p, b2_p)
    return out[:B, :D2]


# ---------------------------- pure-JAX reference ------------------------------
def lstm_reference(tokens, lens, params):
    """Float32 reference with identical semantics (self-check only)."""
    embed, w_ih, w_hh, b = params["embed"], params["w_ih"], params["w_hh"], params["b"]
    w1, b1, w2, b2 = params["w1"], params["b1"], params["w2"], params["b2"]
    B, T = tokens.shape
    H = w_hh.shape[0]
    x = jnp.take(embed, tokens, axis=0)                   # [B, T, E]
    h = jnp.zeros((B, H), jnp.float32)
    c = jnp.zeros((B, H), jnp.float32)
    for t in range(T):
        g = x[:, t] @ w_ih + h @ w_hh + b
        i = jax.nn.sigmoid(g[:, :H])
        f = jax.nn.sigmoid(g[:, H:2 * H])
        gg = jnp.tanh(g[:, 2 * H:3 * H])
        o = jax.nn.sigmoid(g[:, 3 * H:])
        c_new = f * c + i * gg
        h_new = o * jnp.tanh(c_new)
        valid = (lens > t)[:, None]
        h = jnp.where(valid, h_new, h)
        c = jnp.where(valid, c_new, c)
    z1 = jnp.tanh(h @ w1 + b1)
    return jax.nn.softmax(z1 @ w2 + b2, axis=1)


def init_params(key, *, hidden_layer_lstm, hidden_layer_dim, output_dim,
                embed_dim, vocab_size):
    ks = jax.random.split(key, 8)
    H, D1, D2, E, V = hidden_layer_lstm, hidden_layer_dim, output_dim, embed_dim, vocab_size
    scale = 0.1
    embed = scale * jax.random.normal(ks[0], (V + 1, E), jnp.float32)
    embed = embed.at[V].set(0.0)                           # padding_idx row = 0
    params = {
        "embed": embed,
        "w_ih": scale * jax.random.normal(ks[1], (E, 4 * H), jnp.float32),
        "w_hh": scale * jax.random.normal(ks[2], (H, 4 * H), jnp.float32),
        "b":    scale * jax.random.normal(ks[3], (1, 4 * H), jnp.float32),
        "w1":   scale * jax.random.normal(ks[4], (H, D1), jnp.float32),
        "b1":   scale * jax.random.normal(ks[5], (1, D1), jnp.float32),
        "w2":   scale * jax.random.normal(ks[6], (D1, D2), jnp.float32),
        "b2":   scale * jax.random.normal(ks[7], (1, D2), jnp.float32),
    }
    return params


if __name__ == "__main__":
    hidden_layer_lstm = 32
    hidden_layer_dim = 32
    output_dim = 8
    embed_dim = 16
    vocab_size = 50
    padding_idx = vocab_size

    B, T = 2, 8

    key = jax.random.PRNGKey(0)
    pkey, tkey = jax.random.split(key)
    params = init_params(pkey,
                         hidden_layer_lstm=hidden_layer_lstm,
                         hidden_layer_dim=hidden_layer_dim,
                         output_dim=output_dim,
                         embed_dim=embed_dim,
                         vocab_size=vocab_size)

    # Variable-length integer sequences, padded with padding_idx (like pad_sequence).
    lens = jnp.array([T, 5], dtype=jnp.int32)
    tokens = jax.random.randint(tkey, (B, T), 0, vocab_size, dtype=jnp.int32)
    pos = jnp.arange(T)[None, :]
    tokens = jnp.where(pos < lens[:, None], tokens, padding_idx)

    y = lstm_forward(tokens, lens, params)                 # [B, output_dim], rows sum to 1
    jax.block_until_ready(y)

    y_ref = lstm_reference(tokens, lens, params)
    err = float(jnp.max(jnp.abs(y - y_ref)))
    assert err < 5e-2, f"kernel/reference mismatch: max abs err {err}"
    print("KERNEL_OK")
</pallas_src>

<mosaic_0001>
module attributes {stable_mosaic.version = 11 : i64} {
  func.func @_lstm_head_kernel(%arg0: i32, %arg1: memref<1xi32, #tpu.memory_space<smem>>, %arg2: memref<8x8x128xbf16, #tpu.memory_space<vmem>>, %arg3: memref<8x1xi32, #tpu.memory_space<vmem>>, %arg4: memref<32x128xbf16, #tpu.memory_space<vmem>>, %arg5: memref<32x128xbf16, #tpu.memory_space<vmem>>, %arg6: memref<1x128xf32, #tpu.memory_space<vmem>>, %arg7: memref<128x128xbf16, #tpu.memory_space<vmem>>, %arg8: memref<1x128xf32, #tpu.memory_space<vmem>>, %arg9: memref<8x128xf32, #tpu.memory_space<vmem>>, %arg10: memref<8x32xf32, #tpu.memory_space<vmem>>, %arg11: memref<8x32xf32, #tpu.memory_space<vmem>>) attributes {dimension_semantics = [#tpu.dimension_semantics<arbitrary>], iteration_bounds = array<i64: 1>, scalar_prefetch = 1 : i64, scratch_operands = 2 : i64, tpu.core_type = #tpu.core_type<tc>, window_params = [{pipeline_mode = #tpu.pipeline_mode<synchronous>, transform_indices = @transform_0, window_bounds = array<i64: 8, 8, 128>}, {pipeline_mode = #tpu.pipeline_mode<synchronous>, transform_indices = @transform_1, window_bounds = array<i64: 8, 1>}, {pipeline_mode = #tpu.pipeline_mode<synchronous>, transform_indices = @transform_2, window_bounds = array<i64: 32, 128>}, {pipeline_mode = #tpu.pipeline_mode<synchronous>, transform_indices = @transform_3, window_bounds = array<i64: 32, 128>}, {pipeline_mode = #tpu.pipeline_mode<synchronous>, transform_indices = @transform_4, window_bounds = array<i64: 1, 128>}, {pipeline_mode = #tpu.pipeline_mode<synchronous>, transform_indices = @transform_5, window_bounds = array<i64: 128, 128>}, {pipeline_mode = #tpu.pipeline_mode<synchronous>, transform_indices = @transform_6, window_bounds = array<i64: 1, 128>}, {pipeline_mode = #tpu.pipeline_mode<synchronous>, transform_indices = @transform_7, window_bounds = array<i64: 8, 128>}]} {
    %c0 = arith.constant 0 : index
    %0 = memref.load %arg1[%c0] : memref<1xi32, #tpu.memory_space<smem>>
    %c0_0 = arith.constant 0 : index
    %c0_1 = arith.constant 0 : index
    %1 = vector.load %arg3[%c0_0, %c0_1] : memref<8x1xi32, #tpu.memory_space<vmem>>, vector<8x1xi32>
    %c0_2 = arith.constant 0 : index
    %c0_3 = arith.constant 0 : index
    %2 = vector.load %arg4[%c0_2, %c0_3] : memref<32x128xbf16, #tpu.memory_space<vmem>>, vector<32x128xbf16>
    %3 = tpu.iota {dimensions = array<i32: 1>} : vector<1x128xi32>
    %c64_i32 = arith.constant 64 : i32
    %4 = vector.broadcast %c64_i32 : i32 to vector<1x128xi32>
    %5 = arith.cmpi sge, %3, %4 : vector<1x128xi32>
    %c96_i32 = arith.constant 96 : i32
    %6 = vector.broadcast %c96_i32 : i32 to vector<1x128xi32>
    %7 = arith.cmpi slt, %3, %6 : vector<1x128xi32>
    %8 = arith.andi %5, %7 : vector<1x128xi1>
    %cst = arith.constant 1.000000e+00 : f32
    %cst_4 = arith.constant 5.000000e-01 : f32
    %9 = vector.broadcast %cst : f32 to vector<1x128xf32>
    %10 = vector.broadcast %cst_4 : f32 to vector<1x128xf32>
    %11 = arith.select %8, %9, %10 : vector<1x128xi1>, vector<1x128xf32>
    %cst_5 = arith.constant 0.000000e+00 : f32
    %cst_6 = arith.constant 5.000000e-01 : f32
    %12 = vector.broadcast %cst_5 : f32 to vector<1x128xf32>
    %13 = vector.broadcast %cst_6 : f32 to vector<1x128xf32>
    %14 = arith.select %8, %12, %13 : vector<1x128xi1>, vector<1x128xf32>
    %cst_7 = arith.constant 0.000000e+00 : f32
    %15 = vector.broadcast %cst_7 : f32 to vector<8x32xf32>
    %c0_8 = arith.constant 0 : index
    %c0_9 = arith.constant 0 : index
    %16 = vector.load %arg10[%c0_8, %c0_9] : memref<8x32xf32, #tpu.memory_space<vmem>>, vector<8x32xf32>
    tpu.vector_store %arg10[%c0_8, %c0_9], %15 {strides = array<i32>} : memref<8x32xf32, #tpu.memory_space<vmem>>, vector<8x32xf32>,
    %cst_10 = arith.constant 0.000000e+00 : f32
    %17 = vector.broadcast %cst_10 : f32 to vector<8x32xf32>
    %c0_11 = arith.constant 0 : index
    %c0_12 = arith.constant 0 : index
    %18 = vector.load %arg11[%c0_11, %c0_12] : memref<8x32xf32, #tpu.memory_space<vmem>>, vector<8x32xf32>
    tpu.vector_store %arg11[%c0_11, %c0_12], %17 {strides = array<i32>} : memref<8x32xf32, #tpu.memory_space<vmem>>, vector<8x32xf32>,
    %c0_i32 = arith.constant 0 : i32
    %19 = arith.cmpi slt, %c0_i32, %0 : i32
    %20 = arith.extui %19 : i1 to i32
    %c0_i32_13 = arith.constant 0 : i32
    %21 = arith.cmpi ne, %20, %c0_i32_13 : i32
    scf.if %21 {
      %c0_37 = arith.constant 0 : index
      %c0_38 = arith.constant 0 : index
      %67 = vector.load %arg10[%c0_37, %c0_38] : memref<8x32xf32, #tpu.memory_space<vmem>>, vector<8x32xf32>
      %c0_39 = arith.constant 0 : index
      %c0_40 = arith.constant 0 : index
      %68 = vector.load %arg11[%c0_39, %c0_40] : memref<8x32xf32, #tpu.memory_space<vmem>>, vector<8x32xf32>
      %69 = arith.index_cast %c0_i32 : i32 to index
      %c0_41 = arith.constant 0 : index
      %c0_42 = arith.constant 0 : index
      %70 = vector.load %arg2[%69, %c0_41, %c0_42] : memref<8x8x128xbf16, #tpu.memory_space<vmem>>, vector<1x8x128xbf16>
      %71 = vector.shape_cast %70 : vector<1x8x128xbf16> to vector<8x128xbf16>
      %72 = arith.extf %71 : vector<8x128xbf16> to vector<8x128xf32>
      %73 = arith.truncf %67 : vector<8x32xf32> to vector<8x32xbf16>
      %cst_43 = arith.constant dense<0.000000e+00> : vector<8x128xf32>
      %74 = tpu.matmul %73, %2, %cst_43 {dimension_numbers = #tpu.dot_dimension_numbers<[1], [0], [0], [1], [0, 0, 1, 1], [], []>} : vector<8x32xbf16>, vector<32x128xbf16>, vector<8x128xf32> -> vector<8x128xf32>
      %75 = arith.addf %72, %74 : vector<8x128xf32>
      %76 = math.tanh %75 : vector<8x128xf32>
      %77 = vector.broadcast %11 : vector<1x128xf32> to vector<8x128xf32>
      %78 = arith.mulf %76, %77 : vector<8x128xf32>
      %79 = vector.broadcast %14 : vector<1x128xf32> to vector<8x128xf32>
      %80 = arith.addf %78, %79 : vector<8x128xf32>
      %81 = vector.extract_strided_slice %80 {offsets = [0, 0], sizes = [8, 32], strides = [1, 1]} : vector<8x128xf32> to vector<8x32xf32>
      %82 = vector.extract_strided_slice %80 {offsets = [0, 32], sizes = [8, 32], strides = [1, 1]} : vector<8x128xf32> to vector<8x32xf32>
      %83 = vector.extract_strided_slice %80 {offsets = [0, 64], sizes = [8, 32], strides = [1, 1]} : vector<8x128xf32> to vector<8x32xf32>
      %84 = vector.extract_strided_slice %80 {offsets = [0, 96], sizes = [8, 32], strides = [1, 1]} : vector<8x128xf32> to vector<8x32xf32>
      %85 = arith.mulf %82, %68 : vector<8x32xf32>
      %86 = arith.mulf %81, %83 : vector<8x32xf32>
      %87 = arith.addf %85, %86 : vector<8x32xf32>
      %88 = math.tanh %87 : vector<8x32xf32>
      %89 = arith.mulf %84, %88 : vector<8x32xf32>
      %90 = vector.broadcast %c0_i32 : i32 to vector<8x1xi32>
      %91 = arith.cmpi sgt, %1, %90 : vector<8x1xi32>
      %92 = vector.shape_cast %91 : vector<8x1xi1> to vector<8x1xi1>
      %93 = vector.broadcast %92 : vector<8x1xi1> to vector<8x32xi1>
      %94 = arith.select %93, %89, %67 : vector<8x32xi1>, vector<8x32xf32>
      %c0_44 = arith.constant 0 : index
      %c0_45 = arith.constant 0 : index
      %95 = vector.load %arg10[%c0_44, %c0_45] : memref<8x32xf32, #tpu.memory_space<vmem>>, vector<8x32xf32>
      tpu.vector_store %arg10[%c0_44, %c0_45], %94 {strides = array<i32>} : memref<8x32xf32, #tpu.memory_space<vmem>>, vector<8x32xf32>,
      %96 = vector.shape_cast %91 : vector<8x1xi1> to vector<8x1xi1>
      %97 = vector.broadcast %96 : vector<8x1xi1> to vector<8x32xi1>
      %98 = arith.select %97, %87, %68 : vector<8x32xi1>, vector<8x32xf32>
      %c0_46 = arith.constant 0 : index
      %c0_47 = arith.constant 0 : index
      %99 = vector.load %arg11[%c0_46, %c0_47] : memref<8x32xf32, #tpu.memory_space<vmem>>, vector<8x32xf32>
      tpu.vector_store %arg11[%c0_46, %c0_47], %98 {strides = array<i32>} : memref<8x32xf32, #tpu.memory_space<vmem>>, vector<8x32xf32>,
    } else {
    }
    %c1_i32 = arith.constant 1 : i32
    %22 = arith.cmpi slt, %c1_i32, %0 : i32
    %23 = arith.extui %22 : i1 to i32
    %c0_i32_14 = arith.constant 0 : i32
    %24 = arith.cmpi ne, %23, %c0_i32_14 : i32
    scf.if %24 {
      %c0_37 = arith.constant 0 : index
      %c0_38 = arith.constant 0 : index
      %67 = vector.load %arg10[%c0_37, %c0_38] : memref<8x32xf32, #tpu.memory_space<vmem>>, vector<8x32xf32>
      %c0_39 = arith.constant 0 : index
      %c0_40 = arith.constant 0 : index
      %68 = vector.load %arg11[%c0_39, %c0_40] : memref<8x32xf32, #tpu.memory_space<vmem>>, vector<8x32xf32>
      %69 = arith.index_cast %c1_i32 : i32 to index
      %c0_41 = arith.constant 0 : index
      %c0_42 = arith.constant 0 : index
      %70 = vector.load %arg2[%69, %c0_41, %c0_42] : memref<8x8x128xbf16, #tpu.memory_space<vmem>>, vector<1x8x128xbf16>
      %71 = vector.shape_cast %70 : vector<1x8x128xbf16> to vector<8x128xbf16>
      %72 = arith.extf %71 : vector<8x128xbf16> to vector<8x128xf32>
      %73 = arith.truncf %67 : vector<8x32xf32> to vector<8x32xbf16>
      %cst_43 = arith.constant dense<0.000000e+00> : vector<8x128xf32>
      %74 = tpu.matmul %73, %2, %cst_43 {dimension_numbers = #tpu.dot_dimension_numbers<[1], [0], [0], [1], [0, 0, 1, 1], [], []>} : vector<8x32xbf16>, vector<32x128xbf16>, vector<8x128xf32> -> vector<8x128xf32>
      %75 = arith.addf %72, %74 : vector<8x128xf32>
      %76 = math.tanh %75 : vector<8x128xf32>
      %77 = vector.broadcast %11 : vector<1x128xf32> to vector<8x128xf32>
      %78 = arith.mulf %76, %77 : vector<8x128xf32>
      %79 = vector.broadcast %14 : vector<1x128xf32> to vector<8x128xf32>
      %80 = arith.addf %78, %79 : vector<8x128xf32>
      %81 = vector.extract_strided_slice %80 {offsets = [0, 0], sizes = [8, 32], strides = [1, 1]} : vector<8x128xf32> to vector<8x32xf32>
      %82 = vector.extract_strided_slice %80 {offsets = [0, 32], sizes = [8, 32], strides = [1, 1]} : vector<8x128xf32> to vector<8x32xf32>
      %83 = vector.extract_strided_slice %80 {offsets = [0, 64], sizes = [8, 32], strides = [1, 1]} : vector<8x128xf32> to vector<8x32xf32>
      %84 = vector.extract_strided_slice %80 {offsets = [0, 96], sizes = [8, 32], strides = [1, 1]} : vector<8x128xf32> to vector<8x32xf32>
      %85 = arith.mulf %82, %68 : vector<8x32xf32>
      %86 = arith.mulf %81, %83 : vector<8x32xf32>
      %87 = arith.addf %85, %86 : vector<8x32xf32>
      %88 = math.tanh %87 : vector<8x32xf32>
      %89 = arith.mulf %84, %88 : vector<8x32xf32>
      %90 = vector.broadcast %c1_i32 : i32 to vector<8x1xi32>
      %91 = arith.cmpi sgt, %1, %90 : vector<8x1xi32>
      %92 = vector.shape_cast %91 : vector<8x1xi1> to vector<8x1xi1>
      %93 = vector.broadcast %92 : vector<8x1xi1> to vector<8x32xi1>
      %94 = arith.select %93, %89, %67 : vector<8x32xi1>, vector<8x32xf32>
      %c0_44 = arith.constant 0 : index
      %c0_45 = arith.constant 0 : index
      %95 = vector.load %arg10[%c0_44, %c0_45] : memref<8x32xf32, #tpu.memory_space<vmem>>, vector<8x32xf32>
      tpu.vector_store %arg10[%c0_44, %c0_45], %94 {strides = array<i32>} : memref<8x32xf32, #tpu.memory_space<vmem>>, vector<8x32xf32>,
      %96 = vector.shape_cast %91 : vector<8x1xi1> to vector<8x1xi1>
      %97 = vector.broadcast %96 : vector<8x1xi1> to vector<8x32xi1>
      %98 = arith.select %97, %87, %68 : vector<8x32xi1>, vector<8x32xf32>
      %c0_46 = arith.constant 0 : index
      %c0_47 = arith.constant 0 : index
      %99 = vector.load %arg11[%c0_46, %c0_47] : memref<8x32xf32, #tpu.memory_space<vmem>>, vector<8x32xf32>
      tpu.vector_store %arg11[%c0_46, %c0_47], %98 {strides = array<i32>} : memref<8x32xf32, #tpu.memory_space<vmem>>, vector<8x32xf32>,
    } else {
    }
    %c2_i32 = arith.constant 2 : i32
    %25 = arith.cmpi slt, %c2_i32, %0 : i32
    %26 = arith.extui %25 : i1 to i32
    %c0_i32_15 = arith.constant 0 : i32
    %27 = arith.cmpi ne, %26, %c0_i32_15 : i32
    scf.if %27 {
      %c0_37 = arith.constant 0 : index
      %c0_38 = arith.constant 0 : index
      %67 = vector.load %arg10[%c0_37, %c0_38] : memref<8x32xf32, #tpu.memory_space<vmem>>, vector<8x32xf32>
      %c0_39 = arith.constant 0 : index
      %c0_40 = arith.constant 0 : index
      %68 = vector.load %arg11[%c0_39, %c0_40] : memref<8x32xf32, #tpu.memory_space<vmem>>, vector<8x32xf32>
      %69 = arith.index_cast %c2_i32 : i32 to index
      %c0_41 = arith.constant 0 : index
      %c0_42 = arith.constant 0 : index
      %70 = vector.load %arg2[%69, %c0_41, %c0_42] : memref<8x8x128xbf16, #tpu.memory_space<vmem>>, vector<1x8x128xbf16>
      %71 = vector.shape_cast %70 : vector<1x8x128xbf16> to vector<8x128xbf16>
      %72 = arith.extf %71 : vector<8x128xbf16> to vector<8x128xf32>
      %73 = arith.truncf %67 : vector<8x32xf32> to vector<8x32xbf16>
      %cst_43 = arith.constant dense<0.000000e+00> : vector<8x128xf32>
      %74 = tpu.matmul %73, %2, %cst_43 {dimension_numbers = #tpu.dot_dimension_numbers<[1], [0], [0], [1], [0, 0, 1, 1], [], []>} : vector<8x32xbf16>, vector<32x128xbf16>, vector<8x128xf32> -> vector<8x128xf32>
      %75 = arith.addf %72, %74 : vector<8x128xf32>
      %76 = math.tanh %75 : vector<8x128xf32>
      %77 = vector.broadcast %11 : vector<1x128xf32> to vector<8x128xf32>
      %78 = arith.mulf %76, %77 : vector<8x128xf32>
      %79 = vector.broadcast %14 : vector<1x128xf32> to vector<8x128xf32>
      %80 = arith.addf %78, %79 : vector<8x128xf32>
      %81 = vector.extract_strided_slice %80 {offsets = [0, 0], sizes = [8, 32], strides = [1, 1]} : vector<8x128xf32> to vector<8x32xf32>
      %82 = vector.extract_strided_slice %80 {offsets = [0, 32], sizes = [8, 32], strides = [1, 1]} : vector<8x128xf32> to vector<8x32xf32>
      %83 = vector.extract_strided_slice %80 {offsets = [0, 64], sizes = [8, 32], strides = [1, 1]} : vector<8x128xf32> to vector<8x32xf32>
      %84 = vector.extract_strided_slice %80 {offsets = [0, 96], sizes = [8, 32], strides = [1, 1]} : vector<8x128xf32> to vector<8x32xf32>
      %85 = arith.mulf %82, %68 : vector<8x32xf32>
      %86 = arith.mulf %81, %83 : vector<8x32xf32>
      %87 = arith.addf %85, %86 : vector<8x32xf32>
      %88 = math.tanh %87 : vector<8x32xf32>
      %89 = arith.mulf %84, %88 : vector<8x32xf32>
      %90 = vector.broadcast %c2_i32 : i32 to vector<8x1xi32>
      %91 = arith.cmpi sgt, %1, %90 : vector<8x1xi32>
      %92 = vector.shape_cast %91 : vector<8x1xi1> to vector<8x1xi1>
      %93 = vector.broadcast %92 : vector<8x1xi1> to vector<8x32xi1>
      %94 = arith.select %93, %89, %67 : vector<8x32xi1>, vector<8x32xf32>
      %c0_44 = arith.constant 0 : index
      %c0_45 = arith.constant 0 : index
      %95 = vector.load %arg10[%c0_44, %c0_45] : memref<8x32xf32, #tpu.memory_space<vmem>>, vector<8x32xf32>
      tpu.vector_store %arg10[%c0_44, %c0_45], %94 {strides = array<i32>} : memref<8x32xf32, #tpu.memory_space<vmem>>, vector<8x32xf32>,
      %96 = vector.shape_cast %91 : vector<8x1xi1> to vector<8x1xi1>
      %97 = vector.broadcast %96 : vector<8x1xi1> to vector<8x32xi1>
      %98 = arith.select %97, %87, %68 : vector<8x32xi1>, vector<8x32xf32>
      %c0_46 = arith.constant 0 : index
      %c0_47 = arith.constant 0 : index
      %99 = vector.load %arg11[%c0_46, %c0_47] : memref<8x32xf32, #tpu.memory_space<vmem>>, vector<8x32xf32>
      tpu.vector_store %arg11[%c0_46, %c0_47], %98 {strides = array<i32>} : memref<8x32xf32, #tpu.memory_space<vmem>>, vector<8x32xf32>,
    } else {
    }
    %c3_i32 = arith.constant 3 : i32
    %28 = arith.cmpi slt, %c3_i32, %0 : i32
    %29 = arith.extui %28 : i1 to i32
    %c0_i32_16 = arith.constant 0 : i32
    %30 = arith.cmpi ne, %29, %c0_i32_16 : i32
    scf.if %30 {
      %c0_37 = arith.constant 0 : index
      %c0_38 = arith.constant 0 : index
      %67 = vector.load %arg10[%c0_37, %c0_38] : memref<8x32xf32, #tpu.memory_space<vmem>>, vector<8x32xf32>
      %c0_39 = arith.constant 0 : index
      %c0_40 = arith.constant 0 : index
      %68 = vector.load %arg11[%c0_39, %c0_40] : memref<8x32xf32, #tpu.memory_space<vmem>>, vector<8x32xf32>
      %69 = arith.index_cast %c3_i32 : i32 to index
      %c0_41 = arith.constant 0 : index
      %c0_42 = arith.constant 0 : index
      %70 = vector.load %arg2[%69, %c0_41, %c0_42] : memref<8x8x128xbf16, #tpu.memory_space<vmem>>, vector<1x8x128xbf16>
      %71 = vector.shape_cast %70 : vector<1x8x128xbf16> to vector<8x128xbf16>
      %72 = arith.extf %71 : vector<8x128xbf16> to vector<8x128xf32>
      %73 = arith.truncf %67 : vector<8x32xf32> to vector<8x32xbf16>
      %cst_43 = arith.constant dense<0.000000e+00> : vector<8x128xf32>
      %74 = tpu.matmul %73, %2, %cst_43 {dimension_numbers = #tpu.dot_dimension_numbers<[1], [0], [0], [1], [0, 0, 1, 1], [], []>} : vector<8x32xbf16>, vector<32x128xbf16>, vector<8x128xf32> -> vector<8x128xf32>
      %75 = arith.addf %72, %74 : vector<8x128xf32>
      %76 = math.tanh %75 : vector<8x128xf32>
      %77 = vector.broadcast %11 : vector<1x128xf32> to vector<8x128xf32>
      %78 = arith.mulf %76, %77 : vector<8x128xf32>
      %79 = vector.broadcast %14 : vector<1x128xf32> to vector<8x128xf32>
      %80 = arith.addf %78, %79 : vector<8x128xf32>
      %81 = vector.extract_strided_slice %80 {offsets = [0, 0], sizes = [8, 32], strides = [1, 1]} : vector<8x128xf32> to vector<8x32xf32>
      %82 = vector.extract_strided_slice %80 {offsets = [0, 32], sizes = [8, 32], strides = [1, 1]} : vector<8x128xf32> to vector<8x32xf32>
      %83 = vector.extract_strided_slice %80 {offsets = [0, 64], sizes = [8, 32], strides = [1, 1]} : vector<8x128xf32> to vector<8x32xf32>
      %84 = vector.extract_strided_slice %80 {offsets = [0, 96], sizes = [8, 32], strides = [1, 1]} : vector<8x128xf32> to vector<8x32xf32>
      %85 = arith.mulf %82, %68 : vector<8x32xf32>
      %86 = arith.mulf %81, %83 : vector<8x32xf32>
      %87 = arith.addf %85, %86 : vector<8x32xf32>
      %88 = math.tanh %87 : vector<8x32xf32>
      %89 = arith.mulf %84, %88 : vector<8x32xf32>
      %90 = vector.broadcast %c3_i32 : i32 to vector<8x1xi32>
      %91 = arith.cmpi sgt, %1, %90 : vector<8x1xi32>
      %92 = vector.shape_cast %91 : vector<8x1xi1> to vector<8x1xi1>
      %93 = vector.broadcast %92 : vector<8x1xi1> to vector<8x32xi1>
      %94 = arith.select %93, %89, %67 : vector<8x32xi1>, vector<8x32xf32>
      %c0_44 = arith.constant 0 : index
      %c0_45 = arith.constant 0 : index
      %95 = vector.load %arg10[%c0_44, %c0_45] : memref<8x32xf32, #tpu.memory_space<vmem>>, vector<8x32xf32>
      tpu.vector_store %arg10[%c0_44, %c0_45], %94 {strides = array<i32>} : memref<8x32xf32, #tpu.memory_space<vmem>>, vector<8x32xf32>,
      %96 = vector.shape_cast %91 : vector<8x1xi1> to vector<8x1xi1>
      %97 = vector.broadcast %96 : vector<8x1xi1> to vector<8x32xi1>
      %98 = arith.select %97, %87, %68 : vector<8x32xi1>, vector<8x32xf32>
      %c0_46 = arith.constant 0 : index
      %c0_47 = arith.constant 0 : index
      %99 = vector.load %arg11[%c0_46, %c0_47] : memref<8x32xf32, #tpu.memory_space<vmem>>, vector<8x32xf32>
      tpu.vector_store %arg11[%c0_46, %c0_47], %98 {strides = array<i32>} : memref<8x32xf32, #tpu.memory_space<vmem>>, vector<8x32xf32>,
    } else {
    }
    %c4_i32 = arith.constant 4 : i32
    %31 = arith.cmpi slt, %c4_i32, %0 : i32
    %32 = arith.extui %31 : i1 to i32
    %c0_i32_17 = arith.constant 0 : i32
    %33 = arith.cmpi ne, %32, %c0_i32_17 : i32
    scf.if %33 {
      %c0_37 = arith.constant 0 : index
      %c0_38 = arith.constant 0 : index
      %67 = vector.load %arg10[%c0_37, %c0_38] : memref<8x32xf32, #tpu.memory_space<vmem>>, vector<8x32xf32>
      %c0_39 = arith.constant 0 : index
      %c0_40 = arith.constant 0 : index
      %68 = vector.load %arg11[%c0_39, %c0_40] : memref<8x32xf32, #tpu.memory_space<vmem>>, vector<8x32xf32>
      %69 = arith.index_cast %c4_i32 : i32 to index
      %c0_41 = arith.constant 0 : index
      %c0_42 = arith.constant 0 : index
      %70 = vector.load %arg2[%69, %c0_41, %c0_42] : memref<8x8x128xbf16, #tpu.memory_space<vmem>>, vector<1x8x128xbf16>
      %71 = vector.shape_cast %70 : vector<1x8x128xbf16> to vector<8x128xbf16>
      %72 = arith.extf %71 : vector<8x128xbf16> to vector<8x128xf32>
      %73 = arith.truncf %67 : vector<8x32xf32> to vector<8x32xbf16>
      %cst_43 = arith.constant dense<0.000000e+00> : vector<8x128xf32>
      %74 = tpu.matmul %73, %2, %cst_43 {dimension_numbers = #tpu.dot_dimension_numbers<[1], [0], [0], [1], [0, 0, 1, 1], [], []>} : vector<8x32xbf16>, vector<32x128xbf16>, vector<8x128xf32> -> vector<8x128xf32>
      %75 = arith.addf %72, %74 : vector<8x128xf32>
      %76 = math.tanh %75 : vector<8x128xf32>
      %77 = vector.broadcast %11 : vector<1x128xf32> to vector<8x128xf32>
      %78 = arith.mulf %76, %77 : vector<8x128xf32>
      %79 = vector.broadcast %14 : vector<1x128xf32> to vector<8x128xf32>
      %80 = arith.addf %78, %79 : vector<8x128xf32>
      %81 = vector.extract_strided_slice %80 {offsets = [0, 0], sizes = [8, 32], strides = [1, 1]} : vector<8x128xf32> to vector<8x32xf32>
      %82 = vector.extract_strided_slice %80 {offsets = [0, 32], sizes = [8, 32], strides = [1, 1]} : vector<8x128xf32> to vector<8x32xf32>
      %83 = vector.extract_strided_slice %80 {offsets = [0, 64], sizes = [8, 32], strides = [1, 1]} : vector<8x128xf32> to vector<8x32xf32>
      %84 = vector.extract_strided_slice %80 {offsets = [0, 96], sizes = [8, 32], strides = [1, 1]} : vector<8x128xf32> to vector<8x32xf32>
      %85 = arith.mulf %82, %68 : vector<8x32xf32>
      %86 = arith.mulf %81, %83 : vector<8x32xf32>
      %87 = arith.addf %85, %86 : vector<8x32xf32>
      %88 = math.tanh %87 : vector<8x32xf32>
      %89 = arith.mulf %84, %88 : vector<8x32xf32>
      %90 = vector.broadcast %c4_i32 : i32 to vector<8x1xi32>
      %91 = arith.cmpi sgt, %1, %90 : vector<8x1xi32>
      %92 = vector.shape_cast %91 : vector<8x1xi1> to vector<8x1xi1>
      %93 = vector.broadcast %92 : vector<8x1xi1> to vector<8x32xi1>
      %94 = arith.select %93, %89, %67 : vector<8x32xi1>, vector<8x32xf32>
      %c0_44 = arith.constant 0 : index
      %c0_45 = arith.constant 0 : index
      %95 = vector.load %arg10[%c0_44, %c0_45] : memref<8x32xf32, #tpu.memory_space<vmem>>, vector<8x32xf32>
      tpu.vector_store %arg10[%c0_44, %c0_45], %94 {strides = array<i32>} : memref<8x32xf32, #tpu.memory_space<vmem>>, vector<8x32xf32>,
      %96 = vector.shape_cast %91 : vector<8x1xi1> to vector<8x1xi1>
      %97 = vector.broadcast %96 : vector<8x1xi1> to vector<8x32xi1>
      %98 = arith.select %97, %87, %68 : vector<8x32xi1>, vector<8x32xf32>
      %c0_46 = arith.constant 0 : index
      %c0_47 = arith.constant 0 : index
      %99 = vector.load %arg11[%c0_46, %c0_47] : memref<8x32xf32, #tpu.memory_space<vmem>>, vector<8x32xf32>
      tpu.vector_store %arg11[%c0_46, %c0_47], %98 {strides = array<i32>} : memref<8x32xf32, #tpu.memory_space<vmem>>, vector<8x32xf32>,
    } else {
    }
    %c5_i32 = arith.constant 5 : i32
    %34 = arith.cmpi slt, %c5_i32, %0 : i32
    %35 = arith.extui %34 : i1 to i32
    %c0_i32_18 = arith.constant 0 : i32
    %36 = arith.cmpi ne, %35, %c0_i32_18 : i32
    scf.if %36 {
      %c0_37 = arith.constant 0 : index
      %c0_38 = arith.constant 0 : index
      %67 = vector.load %arg10[%c0_37, %c0_38] : memref<8x32xf32, #tpu.memory_space<vmem>>, vector<8x32xf32>
      %c0_39 = arith.constant 0 : index
      %c0_40 = arith.constant 0 : index
      %68 = vector.load %arg11[%c0_39, %c0_40] : memref<8x32xf32, #tpu.memory_space<vmem>>, vector<8x32xf32>
      %69 = arith.index_cast %c5_i32 : i32 to index
      %c0_41 = arith.constant 0 : index
      %c0_42 = arith.constant 0 : index
      %70 = vector.load %arg2[%69, %c0_41, %c0_42] : memref<8x8x128xbf16, #tpu.memory_space<vmem>>, vector<1x8x128xbf16>
      %71 = vector.shape_cast %70 : vector<1x8x128xbf16> to vector<8x128xbf16>
      %72 = arith.extf %71 : vector<8x128xbf16> to vector<8x128xf32>
      %73 = arith.truncf %67 : vector<8x32xf32> to vector<8x32xbf16>
      %cst_43 = arith.constant dense<0.000000e+00> : vector<8x128xf32>
      %74 = tpu.matmul %73, %2, %cst_43 {dimension_numbers = #tpu.dot_dimension_numbers<[1], [0], [0], [1], [0, 0, 1, 1], [], []>} : vector<8x32xbf16>, vector<32x128xbf16>, vector<8x128xf32> -> vector<8x128xf32>
      %75 = arith.addf %72, %74 : vector<8x128xf32>
      %76 = math.tanh %75 : vector<8x128xf32>
      %77 = vector.broadcast %11 : vector<1x128xf32> to vector<8x128xf32>
      %78 = arith.mulf %76, %77 : vector<8x128xf32>
      %79 = vector.broadcast %14 : vector<1x128xf32> to vector<8x128xf32>
      %80 = arith.addf %78, %79 : vector<8x128xf32>
      %81 = vector.extract_strided_slice %80 {offsets = [0, 0], sizes = [8, 32], strides = [1, 1]} : vector<8x128xf32> to vector<8x32xf32>
      %82 = vector.extract_strided_slice %80 {offsets = [0, 32], sizes = [8, 32], strides = [1, 1]} : vector<8x128xf32> to vector<8x32xf32>
      %83 = vector.extract_strided_slice %80 {offsets = [0, 64], sizes = [8, 32], strides = [1, 1]} : vector<8x128xf32> to vector<8x32xf32>
      %84 = vector.extract_strided_slice %80 {offsets = [0, 96], sizes = [8, 32], strides = [1, 1]} : vector<8x128xf32> to vector<8x32xf32>
      %85 = arith.mulf %82, %68 : vector<8x32xf32>
      %86 = arith.mulf %81, %83 : vector<8x32xf32>
      %87 = arith.addf %85, %86 : vector<8x32xf32>
      %88 = math.tanh %87 : vector<8x32xf32>
      %89 = arith.mulf %84, %88 : vector<8x32xf32>
      %90 = vector.broadcast %c5_i32 : i32 to vector<8x1xi32>
      %91 = arith.cmpi sgt, %1, %90 : vector<8x1xi32>
      %92 = vector.shape_cast %91 : vector<8x1xi1> to vector<8x1xi1>
      %93 = vector.broadcast %92 : vector<8x1xi1> to vector<8x32xi1>
      %94 = arith.select %93, %89, %67 : vector<8x32xi1>, vector<8x32xf32>
      %c0_44 = arith.constant 0 : index
      %c0_45 = arith.constant 0 : index
      %95 = vector.load %arg10[%c0_44, %c0_45] : memref<8x32xf32, #tpu.memory_space<vmem>>, vector<8x32xf32>
      tpu.vector_store %arg10[%c0_44, %c0_45], %94 {strides = array<i32>} : memref<8x32xf32, #tpu.memory_space<vmem>>, vector<8x32xf32>,
      %96 = vector.shape_cast %91 : vector<8x1xi1> to vector<8x1xi1>
      %97 = vector.broadcast %96 : vector<8x1xi1> to vector<8x32xi1>
      %98 = arith.select %97, %87, %68 : vector<8x32xi1>, vector<8x32xf32>
      %c0_46 = arith.constant 0 : index
      %c0_47 = arith.constant 0 : index
      %99 = vector.load %arg11[%c0_46, %c0_47] : memref<8x32xf32, #tpu.memory_space<vmem>>, vector<8x32xf32>
      tpu.vector_store %arg11[%c0_46, %c0_47], %98 {strides = array<i32>} : memref<8x32xf32, #tpu.memory_space<vmem>>, vector<8x32xf32>,
    } else {
    }
    %c6_i32 = arith.constant 6 : i32
    %37 = arith.cmpi slt, %c6_i32, %0 : i32
    %38 = arith.extui %37 : i1 to i32
    %c0_i32_19 = arith.constant 0 : i32
    %39 = arith.cmpi ne, %38, %c0_i32_19 : i32
    scf.if %39 {
      %c0_37 = arith.constant 0 : index
      %c0_38 = arith.constant 0 : index
      %67 = vector.load %arg10[%c0_37, %c0_38] : memref<8x32xf32, #tpu.memory_space<vmem>>, vector<8x32xf32>
      %c0_39 = arith.constant 0 : index
      %c0_40 = arith.constant 0 : index
      %68 = vector.load %arg11[%c0_39, %c0_40] : memref<8x32xf32, #tpu.memory_space<vmem>>, vector<8x32xf32>
      %69 = arith.index_cast %c6_i32 : i32 to index
      %c0_41 = arith.constant 0 : index
      %c0_42 = arith.constant 0 : index
      %70 = vector.load %arg2[%69, %c0_41, %c0_42] : memref<8x8x128xbf16, #tpu.memory_space<vmem>>, vector<1x8x128xbf16>
      %71 = vector.shape_cast %70 : vector<1x8x128xbf16> to vector<8x128xbf16>
      %72 = arith.extf %71 : vector<8x128xbf16> to vector<8x128xf32>
      %73 = arith.truncf %67 : vector<8x32xf32> to vector<8x32xbf16>
      %cst_43 = arith.constant dense<0.000000e+00> : vector<8x128xf32>
      %74 = tpu.matmul %73, %2, %cst_43 {dimension_numbers = #tpu.dot_dimension_numbers<[1], [0], [0], [1], [0, 0, 1, 1], [], []>} : vector<8x32xbf16>, vector<32x128xbf16>, vector<8x128xf32> -> vector<8x128xf32>
      %75 = arith.addf %72, %74 : vector<8x128xf32>
      %76 = math.tanh %75 : vector<8x128xf32>
      %77 = vector.broadcast %11 : vector<1x128xf32> to vector<8x128xf32>
      %78 = arith.mulf %76, %77 : vector<8x128xf32>
      %79 = vector.broadcast %14 : vector<1x128xf32> to vector<8x128xf32>
      %80 = arith.addf %78, %79 : vector<8x128xf32>
      %81 = vector.extract_strided_slice %80 {offsets = [0, 0], sizes = [8, 32], strides = [1, 1]} : vector<8x128xf32> to vector<8x32xf32>
      %82 = vector.extract_strided_slice %80 {offsets = [0, 32], sizes = [8, 32], strides = [1, 1]} : vector<8x128xf32> to vector<8x32xf32>
      %83 = vector.extract_strided_slice %80 {offsets = [0, 64], sizes = [8, 32], strides = [1, 1]} : vector<8x128xf32> to vector<8x32xf32>
      %84 = vector.extract_strided_slice %80 {offsets = [0, 96], sizes = [8, 32], strides = [1, 1]} : vector<8x128xf32> to vector<8x32xf32>
      %85 = arith.mulf %82, %68 : vector<8x32xf32>
      %86 = arith.mulf %81, %83 : vector<8x32xf32>
      %87 = arith.addf %85, %86 : vector<8x32xf32>
      %88 = math.tanh %87 : vector<8x32xf32>
      %89 = arith.mulf %84, %88 : vector<8x32xf32>
      %90 = vector.broadcast %c6_i32 : i32 to vector<8x1xi32>
      %91 = arith.cmpi sgt, %1, %90 : vector<8x1xi32>
      %92 = vector.shape_cast %91 : vector<8x1xi1> to vector<8x1xi1>
      %93 = vector.broadcast %92 : vector<8x1xi1> to vector<8x32xi1>
      %94 = arith.select %93, %89, %67 : vector<8x32xi1>, vector<8x32xf32>
      %c0_44 = arith.constant 0 : index
      %c0_45 = arith.constant 0 : index
      %95 = vector.load %arg10[%c0_44, %c0_45] : memref<8x32xf32, #tpu.memory_space<vmem>>, vector<8x32xf32>
      tpu.vector_store %arg10[%c0_44, %c0_45], %94 {strides = array<i32>} : memref<8x32xf32, #tpu.memory_space<vmem>>, vector<8x32xf32>,
      %96 = vector.shape_cast %91 : vector<8x1xi1> to vector<8x1xi1>
      %97 = vector.broadcast %96 : vector<8x1xi1> to vector<8x32xi1>
      %98 = arith.select %97, %87, %68 : vector<8x32xi1>, vector<8x32xf32>
      %c0_46 = arith.constant 0 : index
      %c0_47 = arith.constant 0 : index
      %99 = vector.load %arg11[%c0_46, %c0_47] : memref<8x32xf32, #tpu.memory_space<vmem>>, vector<8x32xf32>
      tpu.vector_store %arg11[%c0_46, %c0_47], %98 {strides = array<i32>} : memref<8x32xf32, #tpu.memory_space<vmem>>, vector<8x32xf32>,
    } else {
    }
    %c7_i32 = arith.constant 7 : i32
    %40 = arith.cmpi slt, %c7_i32, %0 : i32
    %41 = arith.extui %40 : i1 to i32
    %c0_i32_20 = arith.constant 0 : i32
    %42 = arith.cmpi ne, %41, %c0_i32_20 : i32
    scf.if %42 {
      %c0_37 = arith.constant 0 : index
      %c0_38 = arith.constant 0 : index
      %67 = vector.load %arg10[%c0_37, %c0_38] : memref<8x32xf32, #tpu.memory_space<vmem>>, vector<8x32xf32>
      %c0_39 = arith.constant 0 : index
      %c0_40 = arith.constant 0 : index
      %68 = vector.load %arg11[%c0_39, %c0_40] : memref<8x32xf32, #tpu.memory_space<vmem>>, vector<8x32xf32>
      %69 = arith.index_cast %c7_i32 : i32 to index
      %c0_41 = arith.constant 0 : index
      %c0_42 = arith.constant 0 : index
      %70 = vector.load %arg2[%69, %c0_41, %c0_42] : memref<8x8x128xbf16, #tpu.memory_space<vmem>>, vector<1x8x128xbf16>
      %71 = vector.shape_cast %70 : vector<1x8x128xbf16> to vector<8x128xbf16>
      %72 = arith.extf %71 : vector<8x128xbf16> to vector<8x128xf32>
      %73 = arith.truncf %67 : vector<8x32xf32> to vector<8x32xbf16>
      %cst_43 = arith.constant dense<0.000000e+00> : vector<8x128xf32>
      %74 = tpu.matmul %73, %2, %cst_43 {dimension_numbers = #tpu.dot_dimension_numbers<[1], [0], [0], [1], [0, 0, 1, 1], [], []>} : vector<8x32xbf16>, vector<32x128xbf16>, vector<8x128xf32> -> vector<8x128xf32>
      %75 = arith.addf %72, %74 : vector<8x128xf32>
      %76 = math.tanh %75 : vector<8x128xf32>
      %77 = vector.broadcast %11 : vector<1x128xf32> to vector<8x128xf32>
      %78 = arith.mulf %76, %77 : vector<8x128xf32>
      %79 = vector.broadcast %14 : vector<1x128xf32> to vector<8x128xf32>
      %80 = arith.addf %78, %79 : vector<8x128xf32>
      %81 = vector.extract_strided_slice %80 {offsets = [0, 0], sizes = [8, 32], strides = [1, 1]} : vector<8x128xf32> to vector<8x32xf32>
      %82 = vector.extract_strided_slice %80 {offsets = [0, 32], sizes = [8, 32], strides = [1, 1]} : vector<8x128xf32> to vector<8x32xf32>
      %83 = vector.extract_strided_slice %80 {offsets = [0, 64], sizes = [8, 32], strides = [1, 1]} : vector<8x128xf32> to vector<8x32xf32>
      %84 = vector.extract_strided_slice %80 {offsets = [0, 96], sizes = [8, 32], strides = [1, 1]} : vector<8x128xf32> to vector<8x32xf32>
      %85 = arith.mulf %82, %68 : vector<8x32xf32>
      %86 = arith.mulf %81, %83 : vector<8x32xf32>
      %87 = arith.addf %85, %86 : vector<8x32xf32>
      %88 = math.tanh %87 : vector<8x32xf32>
      %89 = arith.mulf %84, %88 : vector<8x32xf32>
      %90 = vector.broadcast %c7_i32 : i32 to vector<8x1xi32>
      %91 = arith.cmpi sgt, %1, %90 : vector<8x1xi32>
      %92 = vector.shape_cast %91 : vector<8x1xi1> to vector<8x1xi1>
      %93 = vector.broadcast %92 : vector<8x1xi1> to vector<8x32xi1>
      %94 = arith.select %93, %89, %67 : vector<8x32xi1>, vector<8x32xf32>
      %c0_44 = arith.constant 0 : index
      %c0_45 = arith.constant 0 : index
      %95 = vector.load %arg10[%c0_44, %c0_45] : memref<8x32xf32, #tpu.memory_space<vmem>>, vector<8x32xf32>
      tpu.vector_store %arg10[%c0_44, %c0_45], %94 {strides = array<i32>} : memref<8x32xf32, #tpu.memory_space<vmem>>, vector<8x32xf32>,
      %96 = vector.shape_cast %91 : vector<8x1xi1> to vector<8x1xi1>
      %97 = vector.broadcast %96 : vector<8x1xi1> to vector<8x32xi1>
      %98 = arith.select %97, %87, %68 : vector<8x32xi1>, vector<8x32xf32>
      %c0_46 = arith.constant 0 : index
      %c0_47 = arith.constant 0 : index
      %99 = vector.load %arg11[%c0_46, %c0_47] : memref<8x32xf32, #tpu.memory_space<vmem>>, vector<8x32xf32>
      tpu.vector_store %arg11[%c0_46, %c0_47], %98 {strides = array<i32>} : memref<8x32xf32, #tpu.memory_space<vmem>>, vector<8x32xf32>,
    } else {
    }
    %c8_i32 = arith.constant 8 : i32
    %c0_21 = arith.constant 0 : index
    %c0_22 = arith.constant 0 : index
    %43 = vector.load %arg10[%c0_21, %c0_22] : memref<8x32xf32, #tpu.memory_space<vmem>>, vector<8x32xf32>
    %44 = arith.truncf %43 : vector<8x32xf32> to vector<8x32xbf16>
    %c0_23 = arith.constant 0 : index
    %c0_24 = arith.constant 0 : index
    %45 = vector.load %arg5[%c0_23, %c0_24] : memref<32x128xbf16, #tpu.memory_space<vmem>>, vector<32x128xbf16>
    %cst_25 = arith.constant dense<0.000000e+00> : vector<8x128xf32>
    %46 = tpu.matmul %44, %45, %cst_25 {dimension_numbers = #tpu.dot_dimension_numbers<[1], [0], [0], [1], [0, 0, 1, 1], [], []>} : vector<8x32xbf16>, vector<32x128xbf16>, vector<8x128xf32> -> vector<8x128xf32>
    %c0_26 = arith.constant 0 : index
    %c0_27 = arith.constant 0 : index
    %47 = vector.load %arg6[%c0_26, %c0_27] : memref<1x128xf32, #tpu.memory_space<vmem>>, vector<1x128xf32>
    %48 = vector.broadcast %47 : vector<1x128xf32> to vector<8x128xf32>
    %49 = arith.addf %46, %48 : vector<8x128xf32>
    %50 = math.tanh %49 : vector<8x128xf32>
    %51 = arith.truncf %50 : vector<8x128xf32> to vector<8x128xbf16>
    %c0_28 = arith.constant 0 : index
    %c0_29 = arith.constant 0 : index
    %52 = vector.load %arg7[%c0_28, %c0_29] : memref<128x128xbf16, #tpu.memory_space<vmem>>, vector<128x128xbf16>
    %cst_30 = arith.constant dense<0.000000e+00> : vector<8x128xf32>
    %53 = tpu.matmul %51, %52, %cst_30 {dimension_numbers = #tpu.dot_dimension_numbers<[1], [0], [0], [1], [0, 0, 1, 1], [], []>} : vector<8x128xbf16>, vector<128x128xbf16>, vector<8x128xf32> -> vector<8x128xf32>
    %c0_31 = arith.constant 0 : index
    %c0_32 = arith.constant 0 : index
    %54 = vector.load %arg8[%c0_31, %c0_32] : memref<1x128xf32, #tpu.memory_space<vmem>>, vector<1x128xf32>
    %55 = vector.broadcast %54 : vector<1x128xf32> to vector<8x128xf32>
    %56 = arith.addf %53, %55 : vector<8x128xf32>
    %cst_33 = arith.constant dense<0xFF800000> : vector<8xf32>
    %57 = vector.multi_reduction <maximumf>, %56, %cst_33 [1] : vector<8x128xf32> to vector<8xf32>
    %58 = vector.shape_cast %57 : vector<8xf32> to vector<8x1xf32>
    %59 = vector.broadcast %58 : vector<8x1xf32> to vector<8x128xf32>
    %60 = arith.subf %56, %59 : vector<8x128xf32>
    %61 = math.exp %60 : vector<8x128xf32>
    %cst_34 = arith.constant dense<0.000000e+00> : vector<8xf32>
    %62 = vector.multi_reduction <add>, %61, %cst_34 [1] : vector<8x128xf32> to vector<8xf32>
    %63 = vector.shape_cast %62 : vector<8xf32> to vector<8x1xf32>
    %64 = vector.broadcast %63 : vector<8x1xf32> to vector<8x128xf32>
    %65 = arith.divf %61, %64 : vector<8x128xf32>
    %c0_35 = arith.constant 0 : index
    %c0_36 = arith.constant 0 : index
    %66 = vector.load %arg9[%c0_35, %c0_36] : memref<8x128xf32, #tpu.memory_space<vmem>>, vector<8x128xf32>
    tpu.vector_store %arg9[%c0_35, %c0_36], %65 {strides = array<i32>} : memref<8x128xf32, #tpu.memory_space<vmem>>, vector<8x128xf32>,
    return
  }
  func.func @transform_0(%arg0: i32, %arg1: memref<1xi32, #tpu.memory_space<smem>>) -> (i32, i32, i32) {
    %c0_i32 = arith.constant 0 : i32
    %c0_i32_0 = arith.constant 0 : i32
    %c0_i32_1 = arith.constant 0 : i32
    %c0_i32_2 = arith.constant 0 : i32
    return %c0_i32, %c0_i32_0, %c0_i32_1 : i32, i32, i32
  }
  func.func @transform_1(%arg0: i32, %arg1: memref<1xi32, #tpu.memory_space<smem>>) -> (i32, i32) {
    %c0_i32 = arith.constant 0 : i32
    %c0_i32_0 = arith.constant 0 : i32
    %c0_i32_1 = arith.constant 0 : i32
    return %c0_i32, %c0_i32_0 : i32, i32
  }
  func.func @transform_2(%arg0: i32, %arg1: memref<1xi32, #tpu.memory_space<smem>>) -> (i32, i32) {
    %c0_i32 = arith.constant 0 : i32
    %c0_i32_0 = arith.constant 0 : i32
    %c0_i32_1 = arith.constant 0 : i32
    return %c0_i32, %c0_i32_0 : i32, i32
  }
  func.func @transform_3(%arg0: i32, %arg1: memref<1xi32, #tpu.memory_space<smem>>) -> (i32, i32) {
    %c0_i32 = arith.constant 0 : i32
    %c0_i32_0 = arith.constant 0 : i32
    %c0_i32_1 = arith.constant 0 : i32
    return %c0_i32, %c0_i32_0 : i32, i32
  }
  func.func @transform_4(%arg0: i32, %arg1: memref<1xi32, #tpu.memory_space<smem>>) -> (i32, i32) {
    %c0_i32 = arith.constant 0 : i32
    %c0_i32_0 = arith.constant 0 : i32
    %c0_i32_1 = arith.constant 0 : i32
    return %c0_i32, %c0_i32_0 : i32, i32
  }
  func.func @transform_5(%arg0: i32, %arg1: memref<1xi32, #tpu.memory_space<smem>>) -> (i32, i32) {
    %c0_i32 = arith.constant 0 : i32
    %c0_i32_0 = arith.constant 0 : i32
    %c0_i32_1 = arith.constant 0 : i32
    return %c0_i32, %c0_i32_0 : i32, i32
  }
  func.func @transform_6(%arg0: i32, %arg1: memref<1xi32, #tpu.memory_space<smem>>) -> (i32, i32) {
    %c0_i32 = arith.constant 0 : i32
    %c0_i32_0 = arith.constant 0 : i32
    %c0_i32_1 = arith.constant 0 : i32
    return %c0_i32, %c0_i32_0 : i32, i32
  }
  func.func @transform_7(%arg0: i32, %arg1: memref<1xi32, #tpu.memory_space<smem>>) -> (i32, i32) {
    %c0_i32 = arith.constant 0 : i32
    %c0_i32_0 = arith.constant 0 : i32
    %c0_i32_1 = arith.constant 0 : i32
    return %c0_i32, %c0_i32_0 : i32, i32
  }
}

</mosaic_0001>

<llo_original>
// kernel: tpu_custom_call.1
$region0: #{tpu_custom_call.1}
  #allocation0 [shape = 'u32[]', space=smem, size = 0x4, offset = 0x4, fixed_abs, tag = 'smem constant byte address 0x4 - core index']
  #allocation1 [shape = 'u32[144,128]{1,0:T(1,128)}', space=vmem, size = 0x12000, scoped, tag = 'internal scratch']
  #allocation2 [shape = 'f32[8,32]{1,0:T(8,128)}', space=vmem, size = 0x1000, scoped, tag = 'scratch operand']
  #allocation3 [shape = 'f32[8,32]{1,0:T(8,128)}', space=vmem, size = 0x1000, scoped, tag = 'scratch operand']
  #allocation4 [shape = 's32[1]{0}', space=sflag, size = 0x4, scoped, tag = 'scoped memory for tpu_custom_call.1']
  #allocation5 [shape = 's32[1]{0:T(128)S(6)}', space=smem, size = 0x200, scoped, tag = 'prefetched SMEM operand 0']
  %s0 = inlined_call_operand.<no memory space> [shape: s32[1], index: 0, kind: input, shape index: {}]
  %s1 = inlined_call_operand.hbm [shape: bf16[8,8,128], index: 1, kind: input, shape index: {}]
  %s2 = inlined_call_operand.vmem [shape: s32[8,1], index: 2, kind: input, shape index: {}]
  %s3 = inlined_call_operand.hbm [shape: bf16[32,128], index: 3, kind: input, shape index: {}]
  %s4 = inlined_call_operand.vmem [shape: bf16[32,128], index: 4, kind: input, shape index: {}]
  %s5 = inlined_call_operand.vmem [shape: f32[1,128], index: 5, kind: input, shape index: {}]
  %s6 = inlined_call_operand.hbm [shape: bf16[128,128], index: 6, kind: input, shape index: {}]
  %s7 = inlined_call_operand.vmem [shape: f32[1,128], index: 7, kind: input, shape index: {}]
  %s8 = inlined_call_operand.hbm [shape: f32[8,128], index: 8, kind: output, shape index: {}]
  %s9 = sld [smem:[#allocation0]]
  $region82: #{tpu_custom_call.1} parent=0
    _
  %s11 = ssub.s32 1, %s9
  %s12 = scalar_select 0, %s11, %s9
  %13 = sst [smem:[#allocation5]] %s0
  $region1: #{tpu_custom_call.1} parent=0
    #allocation6 [shape = 'u8[16384]{0}', space=vmem, size = 0x4000, scoped, tag = 'input window, operand 1, single buffered']
    #allocation7 [shape = 's32[1]{0}', space=sflag, size = 0x4, scoped, tag = 'scoped memory for tpu_custom_call.1']
    #allocation8 [shape = 's32[1]{0}', space=sflag, size = 0x4, scoped, tag = 'scoped memory for tpu_custom_call.1']
    #allocation9 [shape = 'u8[8192]{0}', space=vmem, size = 0x2000, scoped, tag = 'input window, operand 3, single buffered']
    #allocation10 [shape = 's32[1]{0}', space=sflag, size = 0x4, scoped, tag = 'scoped memory for tpu_custom_call.1']
    #allocation11 [shape = 'u8[32768]{0}', space=vmem, size = 0x8000, scoped, tag = 'input window, operand 6, single buffered']
    #allocation12 [shape = 'u8[4096]{0}', space=vmem, size = 0x1000, scoped, tag = 'output window, operand 0, single buffered']
    %14 = vsyncpa [#allocation7], 0
    %15 = vsyncpa [#allocation10], 0
    %16 = vsyncpa [#allocation8], 0
    // Predicated region
    $region2: #{tpu_custom_call.1} parent=1 // pred_check
      _
    $region3: #{tpu_custom_call.1} parent=1 // pred_check_branch
      %18 = sbr.rel (0) target = $region5
    $region4: #{tpu_custom_call.1} parent=1 // pred_region
      %s20 = ssub.s32 512, 512
      %21 = vsyncadd [#allocation7], %s20
      %s22 = sshll.u32 [#allocation6], 4
      %s23 = int_to_ptr.vmem [resolvable:$true] %s22
      %28 = dma.hbm_to_vmem [thread:$0]  %s1, 512, %s23, [#allocation7], 64, 64, 4
    $region5: #{tpu_custom_call.1} parent=1 // pred_fallthru
      _
    // Predicated region
    $region6: #{tpu_custom_call.1} parent=1 // pred_check
      _
    $region7: #{tpu_custom_call.1} parent=1 // pred_check_branch
      %30 = sbr.rel (0) target = $region9
    $region8: #{tpu_custom_call.1} parent=1 // pred_region
      _
    $region9: #{tpu_custom_call.1} parent=1 // pred_fallthru
      _
    // Predicated region
    $region10: #{tpu_custom_call.1} parent=1 // pred_check
      _
    $region11: #{tpu_custom_call.1} parent=1 // pred_check_branch
      %32 = sbr.rel (0) target = $region13
    $region12: #{tpu_custom_call.1} parent=1 // pred_region
      %s34 = ssub.s32 256, 256
      %35 = vsyncadd [#allocation10], %s34
      %s36 = sshll.u32 [#allocation9], 4
      %s37 = int_to_ptr.vmem [resolvable:$true] %s36
      %42 = dma.hbm_to_vmem [thread:$0]  %s3, 256, %s37, [#allocation10], 64, 64, 4
    $region13: #{tpu_custom_call.1} parent=1 // pred_fallthru
      _
    // Predicated region
    $region14: #{tpu_custom_call.1} parent=1 // pred_check
      _
    $region15: #{tpu_custom_call.1} parent=1 // pred_check_branch
      %44 = sbr.rel (0) target = $region17
    $region16: #{tpu_custom_call.1} parent=1 // pred_region
      _
    $region17: #{tpu_custom_call.1} parent=1 // pred_fallthru
      _
    // Predicated region
    $region18: #{tpu_custom_call.1} parent=1 // pred_check
      _
    $region19: #{tpu_custom_call.1} parent=1 // pred_check_branch
      %46 = sbr.rel (0) target = $region21
    $region20: #{tpu_custom_call.1} parent=1 // pred_region
      _
    $region21: #{tpu_custom_call.1} parent=1 // pred_fallthru
      _
    // Predicated region
    $region22: #{tpu_custom_call.1} parent=1 // pred_check
      _
    $region23: #{tpu_custom_call.1} parent=1 // pred_check_branch
      %48 = sbr.rel (0) target = $region25
    $region24: #{tpu_custom_call.1} parent=1 // pred_region
      %s50 = ssub.s32 1024, 1024
      %51 = vsyncadd [#allocation10], %s50
      %s52 = sshll.u32 [#allocation11], 4
      %s53 = int_to_ptr.vmem [resolvable:$true] %s52
      %58 = dma.hbm_to_vmem [thread:$0]  %s6, 1024, %s53, [#allocation10], 64, 64, 4
    $region25: #{tpu_custom_call.1} parent=1 // pred_fallthru
      _
    // Predicated region
    $region26: #{tpu_custom_call.1} parent=1 // pred_check
      _
    $region27: #{tpu_custom_call.1} parent=1 // pred_check_branch
      %60 = sbr.rel (0) target = $region29
    $region28: #{tpu_custom_call.1} parent=1 // pred_region
      _
    $region29: #{tpu_custom_call.1} parent=1 // pred_fallthru
      _
    // Predicated region
    $region30: #{tpu_custom_call.1} parent=1 // pred_check
      _
    $region31: #{tpu_custom_call.1} parent=1 // pred_check_branch
      %62 = sbr.rel (0) target = $region33
    $region32: #{tpu_custom_call.1} parent=1 // pred_region
      %63 = dma.done [#allocation7], 512
    $region33: #{tpu_custom_call.1} parent=1 // pred_fallthru
      _
    // Predicated region
    $region34: #{tpu_custom_call.1} parent=1 // pred_check
      _
    $region35: #{tpu_custom_call.1} parent=1 // pred_check_branch
      %65 = sbr.rel (0) target = $region37
    $region36: #{tpu_custom_call.1} parent=1 // pred_region
      %66 = dma.done [#allocation10], 256
    $region37: #{tpu_custom_call.1} parent=1 // pred_fallthru
      _
    // Predicated region
    $region38: #{tpu_custom_call.1} parent=1 // pred_check
      _
    $region39: #{tpu_custom_call.1} parent=1 // pred_check_branch
      %68 = sbr.rel (0) target = $region41
    $region40: #{tpu_custom_call.1} parent=1 // pred_region
      %69 = dma.done [#allocation10], 1024
    $region41: #{tpu_custom_call.1} parent=1 // pred_fallthru
      _
    %s71 = sld [smem:[#allocation5]]
    %v72 = vld [vmem:[%s2] sm:$0xff]
    %v73 = vld [vmem:[#allocation9] sm:$0xf]
    %v74 = vld [vmem:[#allocation9 + $0x4] sm:$0xf]
    %v75 = vld [vmem:[#allocation9 + $0x8] sm:$0xf]
    %v76 = vld [vmem:[#allocation9 + $0xc] sm:$0xf]
    %v77 = vlaneseq
    %v78 = vand.u32 %v77, 127
    %vm79 = vcmp.ge.s32.totalorder %v78, 64
    %vm80 = vcmp.lt.s32.totalorder %v78, 96
    %vm81 = vmand %vm79, %vm80
    %v82 = vsel %vm81, 1.0, 0.5
    %v83 = vsel %vm81, 0.0, 0.5
    %vm84 = vcmask 261120
    %85 = vst.msk [vmem:[#allocation2] sm:$0xff] %vm84, 0.0
    %86 = vst.msk [vmem:[#allocation3] sm:$0xff] %vm84, 0.0
    %p87 = scmp.gt.s32.totalorder %s71, 0
    // Predicated region
    $region42: #{tpu_custom_call.1} parent=1 // pred_check
      %p88 = pneg %p87
    $region43: #{tpu_custom_call.1} parent=1 // pred_check_branch
      %90 = sbr.rel (%p88) target = $region45
    $region44: #{tpu_custom_call.1} parent=1 // pred_region
      %v91 = vld [vmem:[#allocation2] sm:$0xff]
      %v92 = vld [vmem:[#allocation3] sm:$0xff]
      %v93 = vld [vmem:[#allocation6] sm:$0xf]
      %v94 = vunpack.c.l.bf16 %v93
      %v95 = vpack.c.bf16 %v91, %v91
      %v100 = vunpack.c.l.b16 %v73
      %v101 = vunpack.c.l.b16 %v74
      %v102 = vunpack.c.l.b16 %v75
      %v103 = vunpack.c.l.b16 %v76
      %v104 = vpack.c.b16 %v101, %v100
      %v105 = vpack.c.b16 %v103, %v102
      %v109 = vsel %vm84, %v95, 0
      %111 = vmatprep.subr.bf16.mxu0 0
      %112 = vmatpush1.bf16.msra.mxu0 0
      %113 = vmatprep.subr.bf16.mxu0 0
      %114 = vmatpush1.bf16.msra.mxu0 0
      %115 = vmatprep.subr.bf16.mxu0 0
      %116 = vmatpush1.bf16.msra.mxu0 0
      %117 = vmatprep.subr.bf16.mxu0 0
      %118 = vmatpush1.bf16.msra.mxu0 0
      %119 = vmatprep.subr.bf16.mxu0 0
      %120 = vmatpush1.bf16.msra.mxu0 0
      %121 = vmatprep.subr.bf16.mxu0 0
      %122 = vmatpush1.bf16.msra.mxu0 0
      %123 = vmatprep.subr.bf16.mxu0 0
      %124 = vmatpush1.bf16.msra.mxu0 %v105
      %125 = vmatprep.subr.bf16.mxu0 0
      %126 = vmatpush1.bf16.msra.mxu0 %v104
      %127 = vmatprep.subr.bf16.mxu0 0
      %128 = vmatpush2.bf16.msra.mxu0 0
      %129 = vmatprep.subr.bf16.mxu0 0
      %130 = vmatpush2.bf16.msra.mxu0 0
      %131 = vmatprep.subr.bf16.mxu0 0
      %132 = vmatpush2.bf16.msra.mxu0 0
      %133 = vmatprep.subr.bf16.mxu0 0
      %134 = vmatpush2.bf16.msra.mxu0 0
      %135 = vmatprep.subr.bf16.mxu0 0
      %136 = vmatpush2.bf16.msra.mxu0 0
      %137 = vmatprep.subr.bf16.mxu0 0
      %138 = vmatpush2.bf16.msra.mxu0 0
      %139 = vmatprep.subr.bf16.mxu0 0
      %140 = vmatpush2.bf16.msra.mxu0 0
      %141 = vmatprep.subr.bf16.mxu0 0
      %142 = vmatpush2.bf16.msra.mxu0 0
      %143 = vmatprep.mubr.bf16.mxu0 0
      %144 = vmatmul.mubr.bf16.gmra.mxu0 %v109
      %v145 = vpop.f32.mrf.mxu0
      %v146 = vadd.f32 0.0, %v145
      %v147 = vpop.f32.mrf.mxu0
      %v148 = vpop.f32.mrf.mxu0
      %v149 = vpop.f32.mrf.mxu0
      %150 = vdwg.mxu0
      %v151 = vadd.f32 %v94, %v146
      %v152 = vtanh.pop %v151
      %v153 = vmul.f32 %v152, %v82
      %v154 = vadd.f32 %v153, %v83
      %156 = vrot.lane.b32.xlu0 %v92, 32
      %v157 = vpop.permute.xlu0 %156
      %v159 = vmul.f32 %v154, %v157
      %161 = vrot.lane.b32.xlu0 %v154, 64
      %v162 = vpop.permute.xlu0 %161
      %v164 = vmul.f32 %v154, %v162
      %166 = vrot.lane.b32.xlu0 %v164, 32
      %v167 = vpop.permute.xlu0 %166
      %v169 = vadd.f32 %v159, %v167
      %v170 = vtanh.pop %v169
      %172 = vrot.lane.b32.xlu0 %v170, 64
      %v173 = vpop.permute.xlu0 %172
      %v175 = vmul.f32 %v154, %v173
      %vm176 = vcmp.gt.s32.totalorder %v72, 0
      %v177 = vsel %vm176, 1, 0
      %178 = vset.pattern.permute.xlu0 0
      %179 = vperm.xlu0 %178, %v177
      %v180 = vpop.permute.xlu0 %179
      %vm181 = vcmp.eq.s32.totalorder %v180, 1
      %183 = vrot.lane.b32.xlu0 %v91, 96
      %v184 = vpop.permute.xlu0 %183
      %v186 = vsel %vm181, %v175, %v184
      %188 = vrot.lane.b32.xlu0 %v186, 32
      %v189 = vpop.permute.xlu0 %188
      %191 = vst.msk [vmem:[#allocation2] sm:$0xff] %vm84, %v189
      %v192 = vsel %vm181, %v169, %v157
      %194 = vrot.lane.b32.xlu0 %v192, 96
      %v195 = vpop.permute.xlu0 %194
      %197 = vst.msk [vmem:[#allocation3] sm:$0xff] %vm84, %v195
    $region45: #{tpu_custom_call.1} parent=1 // pred_fallthru
      _
    %p198 = scmp.gt.s32.totalorder %s71, 1
    // Predicated region
    $region46: #{tpu_custom_call.1} parent=1 // pred_check
      %p199 = pneg %p198
    $region47: #{tpu_custom_call.1} parent=1 // pred_check_branch
      %201 = sbr.rel (%p199) target = $region49
    $region48: #{tpu_custom_call.1} parent=1 // pred_region
      %v202 = vld [vmem:[#allocation2] sm:$0xff]
      %v203 = vld [vmem:[#allocation3] sm:$0xff]
      %s204 = scalar_lea.vmem [#allocation6], 4
      %v205 = vld [vmem:[%s204] sm:$0xf]
      %v206 = vunpack.c.l.bf16 %v205
      %v207 = vpack.c.bf16 %v202, %v202
      %v212 = vunpack.c.l.b16 %v73
      %v213 = vunpack.c.l.b16 %v74
      %v214 = vunpack.c.l.b16 %v75
      %v215 = vunpack.c.l.b16 %v76
      %v216 = vpack.c.b16 %v213, %v212
      %v217 = vpack.c.b16 %v215, %v214
      %v221 = vsel %vm84, %v207, 0
      %223 = vmatprep.subr.bf16.mxu0 0
      %224 = vmatpush1.bf16.msra.mxu0 0
      %225 = vmatprep.subr.bf16.mxu0 0
      %226 = vmatpush1.bf16.msra.mxu0 0
      %227 = vmatprep.subr.bf16.mxu0 0
      %228 = vmatpush1.bf16.msra.mxu0 0
      %229 = vmatprep.subr.bf16.mxu0 0
      %230 = vmatpush1.bf16.msra.mxu0 0
      %231 = vmatprep.subr.bf16.mxu0 0
      %232 = vmatpush1.bf16.msra.mxu0 0
      %233 = vmatprep.subr.bf16.mxu0 0
      %234 = vmatpush1.bf16.msra.mxu0 0
      %235 = vmatprep.subr.bf16.mxu0 0
      %236 = vmatpush1.bf16.msra.mxu0 %v217
      %237 = vmatprep.subr.bf16.mxu0 0
      %238 = vmatpush1.bf16.msra.mxu0 %v216
      %239 = vmatprep.subr.bf16.mxu0 0
      %240 = vmatpush2.bf16.msra.mxu0 0
      %241 = vmatprep.subr.bf16.mxu0 0
      %242 = vmatpush2.bf16.msra.mxu0 0
      %243 = vmatprep.subr.bf16.mxu0 0
      %244 = vmatpush2.bf16.msra.mxu0 0
      %245 = vmatprep.subr.bf16.mxu0 0
      %246 = vmatpush2.bf16.msra.mxu0 0
      %247 = vmatprep.subr.bf16.mxu0 0
      %248 = vmatpush2.bf16.msra.mxu0 0
      %249 = vmatprep.subr.bf16.mxu0 0
      %250 = vmatpush2.bf16.msra.mxu0 0
      %251 = vmatprep.subr.bf16.mxu0 0
      %252 = vmatpush2.bf16.msra.mxu0 0
      %253 = vmatprep.subr.bf16.mxu0 0
      %254 = vmatpush2.bf16.msra.mxu0 0
      %255 = vmatprep.mubr.bf16.mxu0 0
      %256 = vmatmul.mubr.bf16.gmra.mxu0 %v221
      %v257 = vpop.f32.mrf.mxu0
      %v258 = vadd.f32 0.0, %v257
      %v259 = vpop.f32.mrf.mxu0
      %v260 = vpop.f32.mrf.mxu0
      %v261 = vpop.f32.mrf.mxu0
      %262 = vdwg.mxu0
      %v263 = vadd.f32 %v206, %v258
      %v264 = vtanh.pop %v263
      %v265 = vmul.f32 %v264, %v82
      %v266 = vadd.f32 %v265, %v83
      %268 = vrot.lane.b32.xlu0 %v203, 32
      %v269 = vpop.permute.xlu0 %268
      %v271 = vmul.f32 %v266, %v269
      %273 = vrot.lane.b32.xlu0 %v266, 64
      %v274 = vpop.permute.xlu0 %273
      %v276 = vmul.f32 %v266, %v274
      %278 = vrot.lane.b32.xlu0 %v276, 32
      %v279 = vpop.permute.xlu0 %278
      %v281 = vadd.f32 %v271, %v279
      %v282 = vtanh.pop %v281
      %284 = vrot.lane.b32.xlu0 %v282, 64
      %v285 = vpop.permute.xlu0 %284
      %v287 = vmul.f32 %v266, %v285
      %vm288 = vcmp.gt.s32.totalorder %v72, 1
      %v289 = vsel %vm288, 1, 0
      %290 = vset.pattern.permute.xlu0 0
      %291 = vperm.xlu0 %290, %v289
      %v292 = vpop.permute.xlu0 %291
      %vm293 = vcmp.eq.s32.totalorder %v292, 1
      %295 = vrot.lane.b32.xlu0 %v202, 96
      %v296 = vpop.permute.xlu0 %295
      %v298 = vsel %vm293, %v287, %v296
      %300 = vrot.lane.b32.xlu0 %v298, 32
      %v301 = vpop.permute.xlu0 %300
      %303 = vst.msk [vmem:[#allocation2] sm:$0xff] %vm84, %v301
      %v304 = vsel %vm293, %v281, %v269
      %306 = vrot.lane.b32.xlu0 %v304, 96
      %v307 = vpop.permute.xlu0 %306
      %309 = vst.msk [vmem:[#allocation3] sm:$0xff] %vm84, %v307
    $region49: #{tpu_custom_call.1} parent=1 // pred_fallthru
      _
    %p310 = scmp.gt.s32.totalorder %s71, 2
    // Predicated region
    $region50: #{tpu_custom_call.1} parent=1 // pred_check
      %p311 = pneg %p310
    $region51: #{tpu_custom_call.1} parent=1 // pred_check_branch
      %313 = sbr.rel (%p311) target = $region53
    $region52: #{tpu_custom_call.1} parent=1 // pred_region
      %v314 = vld [vmem:[#allocation2] sm:$0xff]
      %v315 = vld [vmem:[#allocation3] sm:$0xff]
      %s316 = scalar_lea.vmem [#allocation6], 8
      %v317 = vld [vmem:[%s316] sm:$0xf]
      %v318 = vunpack.c.l.bf16 %v317
      %v319 = vpack.c.bf16 %v314, %v314
      %v324 = vunpack.c.l.b16 %v73
      %v325 = vunpack.c.l.b16 %v74
      %v326 = vunpack.c.l.b16 %v75
      %v327 = vunpack.c.l.b16 %v76
      %v328 = vpack.c.b16 %v325, %v324
      %v329 = vpack.c.b16 %v327, %v326
      %v333 = vsel %vm84, %v319, 0
      %335 = vmatprep.subr.bf16.mxu0 0
      %336 = vmatpush1.bf16.msra.mxu0 0
      %337 = vmatprep.subr.bf16.mxu0 0
      %338 = vmatpush1.bf16.msra.mxu0 0
      %339 = vmatprep.subr.bf16.mxu0 0
      %340 = vmatpush1.bf16.msra.mxu0 0
      %341 = vmatprep.subr.bf16.mxu0 0
      %342 = vmatpush1.bf16.msra.mxu0 0
      %343 = vmatprep.subr.bf16.mxu0 0
      %344 = vmatpush1.bf16.msra.mxu0 0
      %345 = vmatprep.subr.bf16.mxu0 0
      %346 = vmatpush1.bf16.msra.mxu0 0
      %347 = vmatprep.subr.bf16.mxu0 0
      %348 = vmatpush1.bf16.msra.mxu0 %v329
      %349 = vmatprep.subr.bf16.mxu0 0
      %350 = vmatpush1.bf16.msra.mxu0 %v328
      %351 = vmatprep.subr.bf16.mxu0 0
      %352 = vmatpush2.bf16.msra.mxu0 0
      %353 = vmatprep.subr.bf16.mxu0 0
      %354 = vmatpush2.bf16.msra.mxu0 0
      %355 = vmatprep.subr.bf16.mxu0 0
      %356 = vmatpush2.bf16.msra.mxu0 0
      %357 = vmatprep.subr.bf16.mxu0 0
      %358 = vmatpush2.bf16.msra.mxu0 0
      %359 = vmatprep.subr.bf16.mxu0 0
      %360 = vmatpush2.bf16.msra.mxu0 0
      %361 = vmatprep.subr.bf16.mxu0 0
      %362 = vmatpush2.bf16.msra.mxu0 0
      %363 = vmatprep.subr.bf16.mxu0 0
      %364 = vmatpush2.bf16.msra.mxu0 0
      %365 = vmatprep.subr.bf16.mxu0 0
      %366 = vmatpush2.bf16.msra.mxu0 0
      %367 = vmatprep.mubr.bf16.mxu0 0
      %368 = vmatmul.mubr.bf16.gmra.mxu0 %v333
      %v369 = vpop.f32.mrf.mxu0
      %v370 = vadd.f32 0.0, %v369
      %v371 = vpop.f32.mrf.mxu0
      %v372 = vpop.f32.mrf.mxu0
      %v373 = vpop.f32.mrf.mxu0
      %374 = vdwg.mxu0
      %v375 = vadd.f32 %v318, %v370
      %v376 = vtanh.pop %v375
      %v377 = vmul.f32 %v376, %v82
      %v378 = vadd.f32 %v377, %v83
      %380 = vrot.lane.b32.xlu0 %v315, 32
      %v381 = vpop.permute.xlu0 %380
      %v383 = vmul.f32 %v378, %v381
      %385 = vrot.lane.b32.xlu0 %v378, 64
      %v386 = vpop.permute.xlu0 %385
      %v388 = vmul.f32 %v378, %v386
      %390 = vrot.lane.b32.xlu0 %v388, 32
      %v391 = vpop.permute.xlu0 %390
      %v393 = vadd.f32 %v383, %v391
      %v394 = vtanh.pop %v393
      %396 = vrot.lane.b32.xlu0 %v394, 64
      %v397 = vpop.permute.xlu0 %396
      %v399 = vmul.f32 %v378, %v397
      %vm400 = vcmp.gt.s32.totalorder %v72, 2
      %v401 = vsel %vm400, 1, 0
      %402 = vset.pattern.permute.xlu0 0
      %403 = vperm.xlu0 %402, %v401
      %v404 = vpop.permute.xlu0 %403
      %vm405 = vcmp.eq.s32.totalorder %v404, 1
      %407 = vrot.lane.b32.xlu0 %v314, 96
      %v408 = vpop.permute.xlu0 %407
      %v410 = vsel %vm405, %v399, %v408
      %412 = vrot.lane.b32.xlu0 %v410, 32
      %v413 = vpop.permute.xlu0 %412
      %415 = vst.msk [vmem:[#allocation2] sm:$0xff] %vm84, %v413
      %v416 = vsel %vm405, %v393, %v381
      %418 = vrot.lane.b32.xlu0 %v416, 96
      %v419 = vpop.permute.xlu0 %418
      %421 = vst.msk [vmem:[#allocation3] sm:$0xff] %vm84, %v419
    $region53: #{tpu_custom_call.1} parent=1 // pred_fallthru
      _
    %p422 = scmp.gt.s32.totalorder %s71, 3
    // Predicated region
    $region54: #{tpu_custom_call.1} parent=1 // pred_check
      %p423 = pneg %p422
    $region55: #{tpu_custom_call.1} parent=1 // pred_check_branch
      %425 = sbr.rel (%p423) target = $region57
    $region56: #{tpu_custom_call.1} parent=1 // pred_region
      %v426 = vld [vmem:[#allocation2] sm:$0xff]
      %v427 = vld [vmem:[#allocation3] sm:$0xff]
      %s428 = scalar_lea.vmem [#allocation6], 12
      %v429 = vld [vmem:[%s428] sm:$0xf]
      %v430 = vunpack.c.l.bf16 %v429
      %v431 = vpack.c.bf16 %v426, %v426
      %v436 = vunpack.c.l.b16 %v73
      %v437 = vunpack.c.l.b16 %v74
      %v438 = vunpack.c.l.b16 %v75
      %v439 = vunpack.c.l.b16 %v76
      %v440 = vpack.c.b16 %v437, %v436
      %v441 = vpack.c.b16 %v439, %v438
      %v445 = vsel %vm84, %v431, 0
      %447 = vmatprep.subr.bf16.mxu0 0
      %448 = vmatpush1.bf16.msra.mxu0 0
      %449 = vmatprep.subr.bf16.mxu0 0
      %450 = vmatpush1.bf16.msra.mxu0 0
      %451 = vmatprep.subr.bf16.mxu0 0
      %452 = vmatpush1.bf16.msra.mxu0 0
      %453 = vmatprep.subr.bf16.mxu0 0
      %454 = vmatpush1.bf16.msra.mxu0 0
      %455 = vmatprep.subr.bf16.mxu0 0
      %456 = vmatpush1.bf16.msra.mxu0 0
      %457 = vmatprep.subr.bf16.mxu0 0
      %458 = vmatpush1.bf16.msra.mxu0 0
      %459 = vmatprep.subr.bf16.mxu0 0
      %460 = vmatpush1.bf16.msra.mxu0 %v441
      %461 = vmatprep.subr.bf16.mxu0 0
      %462 = vmatpush1.bf16.msra.mxu0 %v440
      %463 = vmatprep.subr.bf16.mxu0 0
      %464 = vmatpush2.bf16.msra.mxu0 0
      %465 = vmatprep.subr.bf16.mxu0 0
      %466 = vmatpush2.bf16.msra.mxu0 0
      %467 = vmatprep.subr.bf16.mxu0 0
      %468 = vmatpush2.bf16.msra.mxu0 0
      %469 = vmatprep.subr.bf16.mxu0 0
      %470 = vmatpush2.bf16.msra.mxu0 0
      %471 = vmatprep.subr.bf16.mxu0 0
      %472 = vmatpush2.bf16.msra.mxu0 0
      %473 = vmatprep.subr.bf16.mxu0 0
      %474 = vmatpush2.bf16.msra.mxu0 0
      %475 = vmatprep.subr.bf16.mxu0 0
      %476 = vmatpush2.bf16.msra.mxu0 0
      %477 = vmatprep.subr.bf16.mxu0 0
      %478 = vmatpush2.bf16.msra.mxu0 0
      %479 = vmatprep.mubr.bf16.mxu0 0
      %480 = vmatmul.mubr.bf16.gmra.mxu0 %v445
      %v481 = vpop.f32.mrf.mxu0
      %v482 = vadd.f32 0.0, %v481
      %v483 = vpop.f32.mrf.mxu0
      %v484 = vpop.f32.mrf.mxu0
      %v485 = vpop.f32.mrf.mxu0
      %486 = vdwg.mxu0
      %v487 = vadd.f32 %v430, %v482
      %v488 = vtanh.pop %v487
      %v489 = vmul.f32 %v488, %v82
      %v490 = vadd.f32 %v489, %v83
      %492 = vrot.lane.b32.xlu0 %v427, 32
      %v493 = vpop.permute.xlu0 %492
      %v495 = vmul.f32 %v490, %v493
      %497 = vrot.lane.b32.xlu0 %v490, 64
      %v498 = vpop.permute.xlu0 %497
      %v500 = vmul.f32 %v490, %v498
      %502 = vrot.lane.b32.xlu0 %v500, 32
      %v503 = vpop.permute.xlu0 %502
      %v505 = vadd.f32 %v495, %v503
      %v506 = vtanh.pop %v505
      %508 = vrot.lane.b32.xlu0 %v506, 64
      %v509 = vpop.permute.xlu0 %508
      %v511 = vmul.f32 %v490, %v509
      %vm512 = vcmp.gt.s32.totalorder %v72, 3
      %v513 = vsel %vm512, 1, 0
      %514 = vset.pattern.permute.xlu0 0
      %515 = vperm.xlu0 %514, %v513
      %v516 = vpop.permute.xlu0 %515
      %vm517 = vcmp.eq.s32.totalorder %v516, 1
      %519 = vrot.lane.b32.xlu0 %v426, 96
      %v520 = vpop.permute.xlu0 %519
      %v522 = vsel %vm517, %v511, %v520
      %524 = vrot.lane.b32.xlu0 %v522, 32
      %v525 = vpop.permute.xlu0 %524
      %527 = vst.msk [vmem:[#allocation2] sm:$0xff] %vm84, %v525
      %v528 = vsel %vm517, %v505, %v493
      %530 = vrot.lane.b32.xlu0 %v528, 96
      %v531 = vpop.permute.xlu0 %530
      %533 = vst.msk [vmem:[#allocation3] sm:$0xff] %vm84, %v531
    $region57: #{tpu_custom_call.1} parent=1 // pred_fallthru
      _
    %p534 = scmp.gt.s32.totalorder %s71, 4
    // Predicated region
    $region58: #{tpu_custom_call.1} parent=1 // pred_check
      %p535 = pneg %p534
    $region59: #{tpu_custom_call.1} parent=1 // pred_check_branch
      %537 = sbr.rel (%p535) target = $region61
    $region60: #{tpu_custom_call.1} parent=1 // pred_region
      %v538 = vld [vmem:[#allocation2] sm:$0xff]
      %v539 = vld [vmem:[#allocation3] sm:$0xff]
      %s540 = scalar_lea.vmem [#allocation6], 16
      %v541 = vld [vmem:[%s540] sm:$0xf]
      %v542 = vunpack.c.l.bf16 %v541
      %v543 = vpack.c.bf16 %v538, %v538
      %v548 = vunpack.c.l.b16 %v73
      %v549 = vunpack.c.l.b16 %v74
      %v550 = vunpack.c.l.b16 %v75
      %v551 = vunpack.c.l.b16 %v76
      %v552 = vpack.c.b16 %v549, %v548
      %v553 = vpack.c.b16 %v551, %v550
      %v557 = vsel %vm84, %v543, 0
      %559 = vmatprep.subr.bf16.mxu0 0
      %560 = vmatpush1.bf16.msra.mxu0 0
      %561 = vmatprep.subr.bf16.mxu0 0
      %562 = vmatpush1.bf16.msra.mxu0 0
      %563 = vmatprep.subr.bf16.mxu0 0
      %564 = vmatpush1.bf16.msra.mxu0 0
      %565 = vmatprep.subr.bf16.mxu0 0
      %566 = vmatpush1.bf16.msra.mxu0 0
      %567 = vmatprep.subr.bf16.mxu0 0
      %568 = vmatpush1.bf16.msra.mxu0 0
      %569 = vmatprep.subr.bf16.mxu0 0
      %570 = vmatpush1.bf16.msra.mxu0 0
      %571 = vmatprep.subr.bf16.mxu0 0
      %572 = vmatpush1.bf16.msra.mxu0 %v553
      %573 = vmatprep.subr.bf16.mxu0 0
      %574 = vmatpush1.bf16.msra.mxu0 %v552
      %575 = vmatprep.subr.bf16.mxu0 0
      %576 = vmatpush2.bf16.msra.mxu0 0
      %577 = vmatprep.subr.bf16.mxu0 0
      %578 = vmatpush2.bf16.msra.mxu0 0
      %579 = vmatprep.subr.bf16.mxu0 0
      %580 = vmatpush2.bf16.msra.mxu0 0
      %581 = vmatprep.subr.bf16.mxu0 0
      %582 = vmatpush2.bf16.msra.mxu0 0
      %583 = vmatprep.subr.bf16.mxu0 0
      %584 = vmatpush2.bf16.msra.mxu0 0
      %585 = vmatprep.subr.bf16.mxu0 0
      %586 = vmatpush2.bf16.msra.mxu0 0
      %587 = vmatprep.subr.bf16.mxu0 0
      %588 = vmatpush2.bf16.msra.mxu0 0
      %589 = vmatprep.subr.bf16.mxu0 0
      %590 = vmatpush2.bf16.msra.mxu0 0
      %591 = vmatprep.mubr.bf16.mxu0 0
      %592 = vmatmul.mubr.bf16.gmra.mxu0 %v557
      %v593 = vpop.f32.mrf.mxu0
      %v594 = vadd.f32 0.0, %v593
      %v595 = vpop.f32.mrf.mxu0
      %v596 = vpop.f32.mrf.mxu0
      %v597 = vpop.f32.mrf.mxu0
      %598 = vdwg.mxu0
      %v599 = vadd.f32 %v542, %v594
      %v600 = vtanh.pop %v599
      %v601 = vmul.f32 %v600, %v82
      %v602 = vadd.f32 %v601, %v83
      %604 = vrot.lane.b32.xlu0 %v539, 32
      %v605 = vpop.permute.xlu0 %604
      %v607 = vmul.f32 %v602, %v605
      %609 = vrot.lane.b32.xlu0 %v602, 64
      %v610 = vpop.permute.xlu0 %609
      %v612 = vmul.f32 %v602, %v610
      %614 = vrot.lane.b32.xlu0 %v612, 32
      %v615 = vpop.permute.xlu0 %614
      %v617 = vadd.f32 %v607, %v615
      %v618 = vtanh.pop %v617
      %620 = vrot.lane.b32.xlu0 %v618, 64
      %v621 = vpop.permute.xlu0 %620
      %v623 = vmul.f32 %v602, %v621
      %vm624 = vcmp.gt.s32.totalorder %v72, 4
      %v625 = vsel %vm624, 1, 0
      %626 = vset.pattern.permute.xlu0 0
      %627 = vperm.xlu0 %626, %v625
      %v628 = vpop.permute.xlu0 %627
      %vm629 = vcmp.eq.s32.totalorder %v628, 1
      %631 = vrot.lane.b32.xlu0 %v538, 96
      %v632 = vpop.permute.xlu0 %631
      %v634 = vsel %vm629, %v623, %v632
      %636 = vrot.lane.b32.xlu0 %v634, 32
      %v637 = vpop.permute.xlu0 %636
      %639 = vst.msk [vmem:[#allocation2] sm:$0xff] %vm84, %v637
      %v640 = vsel %vm629, %v617, %v605
      %642 = vrot.lane.b32.xlu0 %v640, 96
      %v643 = vpop.permute.xlu0 %642
      %645 = vst.msk [vmem:[#allocation3] sm:$0xff] %vm84, %v643
    $region61: #{tpu_custom_call.1} parent=1 // pred_fallthru
      _
    %p646 = scmp.gt.s32.totalorder %s71, 5
    // Predicated region
    $region62: #{tpu_custom_call.1} parent=1 // pred_check
      %p647 = pneg %p646
    $region63: #{tpu_custom_call.1} parent=1 // pred_check_branch
      %649 = sbr.rel (%p647) target = $region65
    $region64: #{tpu_custom_call.1} parent=1 // pred_region
      %v650 = vld [vmem:[#allocation2] sm:$0xff]
      %v651 = vld [vmem:[#allocation3] sm:$0xff]
      %s652 = scalar_lea.vmem [#allocation6], 20
      %v653 = vld [vmem:[%s652] sm:$0xf]
      %v654 = vunpack.c.l.bf16 %v653
      %v655 = vpack.c.bf16 %v650, %v650
      %v660 = vunpack.c.l.b16 %v73
      %v661 = vunpack.c.l.b16 %v74
      %v662 = vunpack.c.l.b16 %v75
      %v663 = vunpack.c.l.b16 %v76
      %v664 = vpack.c.b16 %v661, %v660
      %v665 = vpack.c.b16 %v663, %v662
      %v669 = vsel %vm84, %v655, 0
      %671 = vmatprep.subr.bf16.mxu0 0
      %672 = vmatpush1.bf16.msra.mxu0 0
      %673 = vmatprep.subr.bf16.mxu0 0
      %674 = vmatpush1.bf16.msra.mxu0 0
      %675 = vmatprep.subr.bf16.mxu0 0
      %676 = vmatpush1.bf16.msra.mxu0 0
      %677 = vmatprep.subr.bf16.mxu0 0
      %678 = vmatpush1.bf16.msra.mxu0 0
      %679 = vmatprep.subr.bf16.mxu0 0
      %680 = vmatpush1.bf16.msra.mxu0 0
      %681 = vmatprep.subr.bf16.mxu0 0
      %682 = vmatpush1.bf16.msra.mxu0 0
      %683 = vmatprep.subr.bf16.mxu0 0
      %684 = vmatpush1.bf16.msra.mxu0 %v665
      %685 = vmatprep.subr.bf16.mxu0 0
      %686 = vmatpush1.bf16.msra.mxu0 %v664
      %687 = vmatprep.subr.bf16.mxu0 0
      %688 = vmatpush2.bf16.msra.mxu0 0
      %689 = vmatprep.subr.bf16.mxu0 0
      %690 = vmatpush2.bf16.msra.mxu0 0
      %691 = vmatprep.subr.bf16.mxu0 0
      %692 = vmatpush2.bf16.msra.mxu0 0
      %693 = vmatprep.subr.bf16.mxu0 0
      %694 = vmatpush2.bf16.msra.mxu0 0
      %695 = vmatprep.subr.bf16.mxu0 0
      %696 = vmatpush2.bf16.msra.mxu0 0
      %697 = vmatprep.subr.bf16.mxu0 0
      %698 = vmatpush2.bf16.msra.mxu0 0
      %699 = vmatprep.subr.bf16.mxu0 0
      %700 = vmatpush2.bf16.msra.mxu0 0
      %701 = vmatprep.subr.bf16.mxu0 0
      %702 = vmatpush2.bf16.msra.mxu0 0
      %703 = vmatprep.mubr.bf16.mxu0 0
      %704 = vmatmul.mubr.bf16.gmra.mxu0 %v669
      %v705 = vpop.f32.mrf.mxu0
      %v706 = vadd.f32 0.0, %v705
      %v707 = vpop.f32.mrf.mxu0
      %v708 = vpop.f32.mrf.mxu0
      %v709 = vpop.f32.mrf.mxu0
      %710 = vdwg.mxu0
      %v711 = vadd.f32 %v654, %v706
      %v712 = vtanh.pop %v711
      %v713 = vmul.f32 %v712, %v82
      %v714 = vadd.f32 %v713, %v83
      %716 = vrot.lane.b32.xlu0 %v651, 32
      %v717 = vpop.permute.xlu0 %716
      %v719 = vmul.f32 %v714, %v717
      %721 = vrot.lane.b32.xlu0 %v714, 64
      %v722 = vpop.permute.xlu0 %721
      %v724 = vmul.f32 %v714, %v722
      %726 = vrot.lane.b32.xlu0 %v724, 32
      %v727 = vpop.permute.xlu0 %726
      %v729 = vadd.f32 %v719, %v727
      %v730 = vtanh.pop %v729
      %732 = vrot.lane.b32.xlu0 %v730, 64
      %v733 = vpop.permute.xlu0 %732
      %v735 = vmul.f32 %v714, %v733
      %vm736 = vcmp.gt.s32.totalorder %v72, 5
      %v737 = vsel %vm736, 1, 0
      %738 = vset.pattern.permute.xlu0 0
      %739 = vperm.xlu0 %738, %v737
      %v740 = vpop.permute.xlu0 %739
      %vm741 = vcmp.eq.s32.totalorder %v740, 1
      %743 = vrot.lane.b32.xlu0 %v650, 96
      %v744 = vpop.permute.xlu0 %743
      %v746 = vsel %vm741, %v735, %v744
      %748 = vrot.lane.b32.xlu0 %v746, 32
      %v749 = vpop.permute.xlu0 %748
      %751 = vst.msk [vmem:[#allocation2] sm:$0xff] %vm84, %v749
      %v752 = vsel %vm741, %v729, %v717
      %754 = vrot.lane.b32.xlu0 %v752, 96
      %v755 = vpop.permute.xlu0 %754
      %757 = vst.msk [vmem:[#allocation3] sm:$0xff] %vm84, %v755
    $region65: #{tpu_custom_call.1} parent=1 // pred_fallthru
      _
    %p758 = scmp.gt.s32.totalorder %s71, 6
    // Predicated region
    $region66: #{tpu_custom_call.1} parent=1 // pred_check
      %p759 = pneg %p758
    $region67: #{tpu_custom_call.1} parent=1 // pred_check_branch
      %761 = sbr.rel (%p759) target = $region69
    $region68: #{tpu_custom_call.1} parent=1 // pred_region
      %v762 = vld [vmem:[#allocation2] sm:$0xff]
      %v763 = vld [vmem:[#allocation3] sm:$0xff]
      %s764 = scalar_lea.vmem [#allocation6], 24
      %v765 = vld [vmem:[%s764] sm:$0xf]
      %v766 = vunpack.c.l.bf16 %v765
      %v767 = vpack.c.bf16 %v762, %v762
      %v772 = vunpack.c.l.b16 %v73
      %v773 = vunpack.c.l.b16 %v74
      %v774 = vunpack.c.l.b16 %v75
      %v775 = vunpack.c.l.b16 %v76
      %v776 = vpack.c.b16 %v773, %v772
      %v777 = vpack.c.b16 %v775, %v774
      %v781 = vsel %vm84, %v767, 0
      %783 = vmatprep.subr.bf16.mxu0 0
      %784 = vmatpush1.bf16.msra.mxu0 0
      %785 = vmatprep.subr.bf16.mxu0 0
      %786 = vmatpush1.bf16.msra.mxu0 0
      %787 = vmatprep.subr.bf16.mxu0 0
      %788 = vmatpush1.bf16.msra.mxu0 0
      %789 = vmatprep.subr.bf16.mxu0 0
      %790 = vmatpush1.bf16.msra.mxu0 0
      %791 = vmatprep.subr.bf16.mxu0 0
      %792 = vmatpush1.bf16.msra.mxu0 0
      %793 = vmatprep.subr.bf16.mxu0 0
      %794 = vmatpush1.bf16.msra.mxu0 0
      %795 = vmatprep.subr.bf16.mxu0 0
      %796 = vmatpush1.bf16.msra.mxu0 %v777
      %797 = vmatprep.subr.bf16.mxu0 0
      %798 = vmatpush1.bf16.msra.mxu0 %v776
      %799 = vmatprep.subr.bf16.mxu0 0
      %800 = vmatpush2.bf16.msra.mxu0 0
      %801 = vmatprep.subr.bf16.mxu0 0
      %802 = vmatpush2.bf16.msra.mxu0 0
      %803 = vmatprep.subr.bf16.mxu0 0
      %804 = vmatpush2.bf16.msra.mxu0 0
      %805 = vmatprep.subr.bf16.mxu0 0
      %806 = vmatpush2.bf16.msra.mxu0 0
      %807 = vmatprep.subr.bf16.mxu0 0
      %808 = vmatpush2.bf16.msra.mxu0 0
      %809 = vmatprep.subr.bf16.mxu0 0
      %810 = vmatpush2.bf16.msra.mxu0 0
      %811 = vmatprep.subr.bf16.mxu0 0
      %812 = vmatpush2.bf16.msra.mxu0 0
      %813 = vmatprep.subr.bf16.mxu0 0
      %814 = vmatpush2.bf16.msra.mxu0 0
      %815 = vmatprep.mubr.bf16.mxu0 0
      %816 = vmatmul.mubr.bf16.gmra.mxu0 %v781
      %v817 = vpop.f32.mrf.mxu0
      %v818 = vadd.f32 0.0, %v817
      %v819 = vpop.f32.mrf.mxu0
      %v820 = vpop.f32.mrf.mxu0
      %v821 = vpop.f32.mrf.mxu0
      %822 = vdwg.mxu0
      %v823 = vadd.f32 %v766, %v818
      %v824 = vtanh.pop %v823
      %v825 = vmul.f32 %v824, %v82
      %v826 = vadd.f32 %v825, %v83
      %828 = vrot.lane.b32.xlu0 %v763, 32
      %v829 = vpop.permute.xlu0 %828
      %v831 = vmul.f32 %v826, %v829
      %833 = vrot.lane.b32.xlu0 %v826, 64
      %v834 = vpop.permute.xlu0 %833
      %v836 = vmul.f32 %v826, %v834
      %838 = vrot.lane.b32.xlu0 %v836, 32
      %v839 = vpop.permute.xlu0 %838
      %v841 = vadd.f32 %v831, %v839
      %v842 = vtanh.pop %v841
      %844 = vrot.lane.b32.xlu0 %v842, 64
      %v845 = vpop.permute.xlu0 %844
      %v847 = vmul.f32 %v826, %v845
      %vm848 = vcmp.gt.s32.totalorder %v72, 6
      %v849 = vsel %vm848, 1, 0
      %850 = vset.pattern.permute.xlu0 0
      %851 = vperm.xlu0 %850, %v849
      %v852 = vpop.permute.xlu0 %851
      %vm853 = vcmp.eq.s32.totalorder %v852, 1
      %855 = vrot.lane.b32.xlu0 %v762, 96
      %v856 = vpop.permute.xlu0 %855
      %v858 = vsel %vm853, %v847, %v856
      %860 = vrot.lane.b32.xlu0 %v858, 32
      %v861 = vpop.permute.xlu0 %860
      %863 = vst.msk [vmem:[#allocation2] sm:$0xff] %vm84, %v861
      %v864 = vsel %vm853, %v841, %v829
      %866 = vrot.lane.b32.xlu0 %v864, 96
      %v867 = vpop.permute.xlu0 %866
      %869 = vst.msk [vmem:[#allocation3] sm:$0xff] %vm84, %v867
    $region69: #{tpu_custom_call.1} parent=1 // pred_fallthru
      _
    %p870 = scmp.gt.s32.totalorder %s71, 7
    // Predicated region
    $region70: #{tpu_custom_call.1} parent=1 // pred_check
      %p871 = pneg %p870
    $region71: #{tpu_custom_call.1} parent=1 // pred_check_branch
      %873 = sbr.rel (%p871) target = $region73
    $region72: #{tpu_custom_call.1} parent=1 // pred_region
      %v874 = vld [vmem:[#allocation2] sm:$0xff]
      %v875 = vld [vmem:[#allocation3] sm:$0xff]
      %s876 = scalar_lea.vmem [#allocation6], 28
      %v877 = vld [vmem:[%s876] sm:$0xf]
      %v878 = vunpack.c.l.bf16 %v877
      %v879 = vpack.c.bf16 %v874, %v874
      %v884 = vunpack.c.l.b16 %v73
      %v885 = vunpack.c.l.b16 %v74
      %v886 = vunpack.c.l.b16 %v75
      %v887 = vunpack.c.l.b16 %v76
      %v888 = vpack.c.b16 %v885, %v884
      %v889 = vpack.c.b16 %v887, %v886
      %v893 = vsel %vm84, %v879, 0
      %895 = vmatprep.subr.bf16.mxu0 0
      %896 = vmatpush1.bf16.msra.mxu0 0
      %897 = vmatprep.subr.bf16.mxu0 0
      %898 = vmatpush1.bf16.msra.mxu0 0
      %899 = vmatprep.subr.bf16.mxu0 0
      %900 = vmatpush1.bf16.msra.mxu0 0
      %901 = vmatprep.subr.bf16.mxu0 0
      %902 = vmatpush1.bf16.msra.mxu0 0
      %903 = vmatprep.subr.bf16.mxu0 0
      %904 = vmatpush1.bf16.msra.mxu0 0
      %905 = vmatprep.subr.bf16.mxu0 0
      %906 = vmatpush1.bf16.msra.mxu0 0
      %907 = vmatprep.subr.bf16.mxu0 0
      %908 = vmatpush1.bf16.msra.mxu0 %v889
      %909 = vmatprep.subr.bf16.mxu0 0
      %910 = vmatpush1.bf16.msra.mxu0 %v888
      %911 = vmatprep.subr.bf16.mxu0 0
      %912 = vmatpush2.bf16.msra.mxu0 0
      %913 = vmatprep.subr.bf16.mxu0 0
      %914 = vmatpush2.bf16.msra.mxu0 0
      %915 = vmatprep.subr.bf16.mxu0 0
      %916 = vmatpush2.bf16.msra.mxu0 0
      %917 = vmatprep.subr.bf16.mxu0 0
      %918 = vmatpush2.bf16.msra.mxu0 0
      %919 = vmatprep.subr.bf16.mxu0 0
      %920 = vmatpush2.bf16.msra.mxu0 0
      %921 = vmatprep.subr.bf16.mxu0 0
      %922 = vmatpush2.bf16.msra.mxu0 0
      %923 = vmatprep.subr.bf16.mxu0 0
      %924 = vmatpush2.bf16.msra.mxu0 0
      %925 = vmatprep.subr.bf16.mxu0 0
      %926 = vmatpush2.bf16.msra.mxu0 0
      %927 = vmatprep.mubr.bf16.mxu0 0
      %928 = vmatmul.mubr.bf16.gmra.mxu0 %v893
      %v929 = vpop.f32.mrf.mxu0
      %v930 = vadd.f32 0.0, %v929
      %v931 = vpop.f32.mrf.mxu0
      %v932 = vpop.f32.mrf.mxu0
      %v933 = vpop.f32.mrf.mxu0
      %934 = vdwg.mxu0
      %v935 = vadd.f32 %v878, %v930
      %v936 = vtanh.pop %v935
      %v937 = vmul.f32 %v936, %v82
      %v938 = vadd.f32 %v937, %v83
      %940 = vrot.lane.b32.xlu0 %v875, 32
      %v941 = vpop.permute.xlu0 %940
      %v943 = vmul.f32 %v938, %v941
      %945 = vrot.lane.b32.xlu0 %v938, 64
      %v946 = vpop.permute.xlu0 %945
      %v948 = vmul.f32 %v938, %v946
      %950 = vrot.lane.b32.xlu0 %v948, 32
      %v951 = vpop.permute.xlu0 %950
      %v953 = vadd.f32 %v943, %v951
      %v954 = vtanh.pop %v953
      %956 = vrot.lane.b32.xlu0 %v954, 64
      %v957 = vpop.permute.xlu0 %956
      %v959 = vmul.f32 %v938, %v957
      %vm960 = vcmp.gt.s32.totalorder %v72, 7
      %v961 = vsel %vm960, 1, 0
      %962 = vset.pattern.permute.xlu0 0
      %963 = vperm.xlu0 %962, %v961
      %v964 = vpop.permute.xlu0 %963
      %vm965 = vcmp.eq.s32.totalorder %v964, 1
      %967 = vrot.lane.b32.xlu0 %v874, 96
      %v968 = vpop.permute.xlu0 %967
      %v970 = vsel %vm965, %v959, %v968
      %972 = vrot.lane.b32.xlu0 %v970, 32
      %v973 = vpop.permute.xlu0 %972
      %975 = vst.msk [vmem:[#allocation2] sm:$0xff] %vm84, %v973
      %v976 = vsel %vm965, %v953, %v941
      %978 = vrot.lane.b32.xlu0 %v976, 96
      %v979 = vpop.permute.xlu0 %978
      %981 = vst.msk [vmem:[#allocation3] sm:$0xff] %vm84, %v979
    $region73: #{tpu_custom_call.1} parent=1 // pred_fallthru
      _
    %v982 = vld [vmem:[#allocation2] sm:$0xff]
    %v983 = vpack.c.bf16 %v982, %v982
    %v984 = vld [vmem:[%s4] sm:$0xf]
    %v985 = vld [vmem:[%s4 + $0x4] sm:$0xf]
    %v986 = vld [vmem:[%s4 + $0x8] sm:$0xf]
    %v987 = vld [vmem:[%s4 + $0xc] sm:$0xf]
    %v988 = vld [vmem:[%s5] sm:$0x1]
    %v990 = vlaneseq
    %v991 = vshrl.u32 %v990, 7
    %v992 = vsub.s32 0, %v991
    %v993 = vrot.slane %v988, %v992
    %v999 = vunpack.c.l.b16 %v984
    %v1000 = vunpack.c.l.b16 %v985
    %v1001 = vunpack.c.l.b16 %v986
    %v1002 = vunpack.c.l.b16 %v987
    %v1003 = vpack.c.b16 %v1000, %v999
    %v1004 = vpack.c.b16 %v1002, %v1001
    %v1008 = vsel %vm84, %v983, 0
    %1010 = vmatprep.subr.bf16.mxu0 0
    %1011 = vmatpush1.bf16.msra.mxu0 0
    %1012 = vmatprep.subr.bf16.mxu0 0
    %1013 = vmatpush1.bf16.msra.mxu0 0
    %1014 = vmatprep.subr.bf16.mxu0 0
    %1015 = vmatpush1.bf16.msra.mxu0 0
    %1016 = vmatprep.subr.bf16.mxu0 0
    %1017 = vmatpush1.bf16.msra.mxu0 0
    %1018 = vmatprep.subr.bf16.mxu0 0
    %1019 = vmatpush1.bf16.msra.mxu0 0
    %1020 = vmatprep.subr.bf16.mxu0 0
    %1021 = vmatpush1.bf16.msra.mxu0 0
    %1022 = vmatprep.subr.bf16.mxu0 0
    %1023 = vmatpush1.bf16.msra.mxu0 %v1004
    %1024 = vmatprep.subr.bf16.mxu0 0
    %1025 = vmatpush1.bf16.msra.mxu0 %v1003
    %1026 = vmatprep.subr.bf16.mxu0 0
    %1027 = vmatpush2.bf16.msra.mxu0 0
    %1028 = vmatprep.subr.bf16.mxu0 0
    %1029 = vmatpush2.bf16.msra.mxu0 0
    %1030 = vmatprep.subr.bf16.mxu0 0
    %1031 = vmatpush2.bf16.msra.mxu0 0
    %1032 = vmatprep.subr.bf16.mxu0 0
    %1033 = vmatpush2.bf16.msra.mxu0 0
    %1034 = vmatprep.subr.bf16.mxu0 0
    %1035 = vmatpush2.bf16.msra.mxu0 0
    %1036 = vmatprep.subr.bf16.mxu0 0
    %1037 = vmatpush2.bf16.msra.mxu0 0
    %1038 = vmatprep.subr.bf16.mxu0 0
    %1039 = vmatpush2.bf16.msra.mxu0 0
    %1040 = vmatprep.subr.bf16.mxu0 0
    %1041 = vmatpush2.bf16.msra.mxu0 0
    %1042 = vmatprep.mubr.bf16.mxu0 0
    %1043 = vmatmul.mubr.bf16.gmra.mxu0 %v1008
    %v1044 = vpop.f32.mrf.mxu0
    %v1045 = vadd.f32 %v993, %v1044
    %v1046 = vpop.f32.mrf.mxu0
    %v1047 = vpop.f32.mrf.mxu0
    %v1048 = vpop.f32.mrf.mxu0
    %1049 = vdwg.mxu0
    %v1050 = vtanh.pop %v1045
    %v1051 = vpack.c.bf16 %v1050, %v1050
    %v1052 = vld [vmem:[#allocation11] sm:$0xf]
    %v1053 = vld [vmem:[#allocation11 + $0x4] sm:$0xf]
    %v1054 = vld [vmem:[#allocation11 + $0x8] sm:$0xf]
    %v1055 = vld [vmem:[#allocation11 + $0xc] sm:$0xf]
    %v1056 = vld [vmem:[#allocation11 + $0x10] sm:$0xf]
    %v1057 = vld [vmem:[#allocation11 + $0x14] sm:$0xf]
    %v1058 = vld [vmem:[#allocation11 + $0x18] sm:$0xf]
    %v1059 = vld [vmem:[#allocation11 + $0x1c] sm:$0xf]
    %v1060 = vld [vmem:[#allocation11 + $0x20] sm:$0xf]
    %v1061 = vld [vmem:[#allocation11 + $0x24] sm:$0xf]
    %v1062 = vld [vmem:[#allocation11 + $0x28] sm:$0xf]
    %v1063 = vld [vmem:[#allocation11 + $0x2c] sm:$0xf]
    %v1064 = vld [vmem:[#allocation11 + $0x30] sm:$0xf]
    %v1065 = vld [vmem:[#allocation11 + $0x34] sm:$0xf]
    %v1066 = vld [vmem:[#allocation11 + $0x38] sm:$0xf]
    %v1067 = vld [vmem:[#allocation11 + $0x3c] sm:$0xf]
    %v1068 = vld [vmem:[%s7] sm:$0x1]
    %v1070 = vlaneseq
    %v1071 = vshrl.u32 %v1070, 7
    %v1072 = vsub.s32 0, %v1071
    %v1073 = vrot.slane %v1068, %v1072
    %v1091 = vunpack.c.l.b16 %v1052
    %v1092 = vunpack.c.l.b16 %v1053
    %v1093 = vunpack.c.l.b16 %v1054
    %v1094 = vunpack.c.l.b16 %v1055
    %v1095 = vunpack.c.l.b16 %v1056
    %v1096 = vunpack.c.l.b16 %v1057
    %v1097 = vunpack.c.l.b16 %v1058
    %v1098 = vunpack.c.l.b16 %v1059
    %v1099 = vunpack.c.l.b16 %v1060
    %v1100 = vunpack.c.l.b16 %v1061
    %v1101 = vunpack.c.l.b16 %v1062
    %v1102 = vunpack.c.l.b16 %v1063
    %v1103 = vunpack.c.l.b16 %v1064
    %v1104 = vunpack.c.l.b16 %v1065
    %v1105 = vunpack.c.l.b16 %v1066
    %v1106 = vunpack.c.l.b16 %v1067
    %v1107 = vpack.c.b16 %v1092, %v1091
    %v1108 = vpack.c.b16 %v1094, %v1093
    %v1109 = vpack.c.b16 %v1096, %v1095
    %v1110 = vpack.c.b16 %v1098, %v1097
    %v1111 = vpack.c.b16 %v1100, %v1099
    %v1112 = vpack.c.b16 %v1102, %v1101
    %v1113 = vpack.c.b16 %v1104, %v1103
    %v1114 = vpack.c.b16 %v1106, %v1105
    %1123 = vmatprep.subr.bf16.mxu0 0
    %1124 = vmatpush1.bf16.msra.mxu0 %v1114
    %1125 = vmatprep.subr.bf16.mxu0 0
    %1126 = vmatpush1.bf16.msra.mxu0 %v1113
    %1127 = vmatprep.subr.bf16.mxu0 0
    %1128 = vmatpush1.bf16.msra.mxu0 %v1112
    %1129 = vmatprep.subr.bf16.mxu0 0
    %1130 = vmatpush1.bf16.msra.mxu0 %v1111
    %1131 = vmatprep.subr.bf16.mxu0 0
    %1132 = vmatpush1.bf16.msra.mxu0 %v1110
    %1133 = vmatprep.subr.bf16.mxu0 0
    %1134 = vmatpush1.bf16.msra.mxu0 %v1109
    %1135 = vmatprep.subr.bf16.mxu0 0
    %1136 = vmatpush1.bf16.msra.mxu0 %v1108
    %1137 = vmatprep.subr.bf16.mxu0 0
    %1138 = vmatpush1.bf16.msra.mxu0 %v1107
    %1139 = vmatprep.subr.bf16.mxu0 0
    %1140 = vmatpush2.bf16.msra.mxu0 0
    %1141 = vmatprep.subr.bf16.mxu0 0
    %1142 = vmatpush2.bf16.msra.mxu0 0
    %1143 = vmatprep.subr.bf16.mxu0 0
    %1144 = vmatpush2.bf16.msra.mxu0 0
    %1145 = vmatprep.subr.bf16.mxu0 0
    %1146 = vmatpush2.bf16.msra.mxu0 0
    %1147 = vmatprep.subr.bf16.mxu0 0
    %1148 = vmatpush2.bf16.msra.mxu0 0
    %1149 = vmatprep.subr.bf16.mxu0 0
    %1150 = vmatpush2.bf16.msra.mxu0 0
    %1151 = vmatprep.subr.bf16.mxu0 0
    %1152 = vmatpush2.bf16.msra.mxu0 0
    %1153 = vmatprep.subr.bf16.mxu0 0
    %1154 = vmatpush2.bf16.msra.mxu0 0
    %1155 = vmatprep.mubr.bf16.mxu0 0
    %1156 = vmatmul.mubr.bf16.gmra.mxu0 %v1051
    %v1157 = vpop.f32.mrf.mxu0
    %v1158 = vadd.f32 %v1073, %v1157
    %v1159 = vpop.f32.mrf.mxu0
    %v1160 = vpop.f32.mrf.mxu0
    %v1161 = vpop.f32.mrf.mxu0
    %1162 = vdwg.mxu0
    %1163 = vmax.xlane.f32.xlu0 %v1158
    %v1164 = vpop.xlane.xlu0 %1163
    %v1165 = vsub.f32 %v1158, %v1164
    %v1166 = vmul.f32 %v1165, 1.442695
    %v1167 = vpow.pop %v1166
    %1168 = vadd.xlane.f32.xlu0 %v1167
    %v1169 = vpop.xlane.xlu0 %1168
    %v1170 = vrcp.pop %v1169
    %v1171 = vmul.f32 %v1167, %v1170
    %1172 = vst [vmem:[#allocation12] sm:$0xff] %v1171
    // Predicated region
    $region74: #{tpu_custom_call.1} parent=1 // pred_check
      _
    $region75: #{tpu_custom_call.1} parent=1 // pred_check_branch
      %1174 = sbr.rel (0) target = $region77
    $region76: #{tpu_custom_call.1} parent=1 // pred_region
      %s1176 = ssub.s32 128, 128
      %1177 = vsyncadd [#allocation8], %s1176
      %s1179 = sshll.u32 [#allocation12], 4
      %s1180 = int_to_ptr.vmem [resolvable:$true] %s1179
      %1182 = dma.vmem_to_hbm [thread:$0]  %s1180, 128, %s8, [#allocation8]
    $region77: #{tpu_custom_call.1} parent=1 // pred_fallthru
      _
    // Predicated region
    $region78: #{tpu_custom_call.1} parent=1 // pred_check
      _
    $region79: #{tpu_custom_call.1} parent=1 // pred_check_branch
      %1184 = sbr.rel (0) target = $region81
    $region80: #{tpu_custom_call.1} parent=1 // pred_region
      %1185 = dma.done [#allocation8], 128
    $region81: #{tpu_custom_call.1} parent=1 // pred_fallthru
      _
    %1186 = vsyncpa [#allocation7], 1
    %1187 = vsyncpa [#allocation10], 1
    %1188 = vsyncpa [#allocation8], 1

</llo_original>
